<compile_context>
chip_gen: v7x
topology: tpu7x:2x2x1
jax: 0.10.0
libtpu: 0.0.40
codegen_flags: <defaults>
</compile_context>

<pallas_src>
import jax
import jax.numpy as jnp
from jax.experimental import pallas as pl
from jax.experimental.pallas import tpu as pltpu

_IN_F = 28 * 28      # 784
_IN_PAD = 896        # 7 * 128  (K dim of fc1, lane-aligned)
_H = 512
_OUT = 10
_OUT_PAD = 128       # lane-dense logits / output


def mnistnet_kernel(x_ref, w1_ref, b1_ref, w2_ref, b2_ref, w3_ref, b3_ref, o_ref):
    x = x_ref[...]                                                     # [TB, 896] bf16

    # fc1 + ReLU (bf16 MXU, f32 accumulate)
    h1 = jnp.dot(x, w1_ref[...], preferred_element_type=jnp.float32) + b1_ref[...]
    h1 = jnp.maximum(h1, 0.0).astype(jnp.bfloat16)                     # [TB, 512]

    # fc2 + ReLU
    h2 = jnp.dot(h1, w2_ref[...], preferred_element_type=jnp.float32) + b2_ref[...]
    h2 = jnp.maximum(h2, 0.0).astype(jnp.bfloat16)                     # [TB, 512]

    # fc3 + softmax over the last dim. Padded lanes carry bias -1e30 (f32), so
    # exp(logit - max) underflows to exactly 0 and they do not perturb the sum.
    logits = jnp.dot(h2, w3_ref[...], preferred_element_type=jnp.float32) + b3_ref[...]
    m = jnp.max(logits, axis=-1, keepdims=True)
    e = jnp.exp(logits - m)
    denom = jnp.sum(e, axis=-1, keepdims=True)
    # Exact divide: the kernel is MXU-bound, so this sits in VPU/EUP slack and
    # gives softmax row sums accurate to f32 precision.
    o_ref[...] = e / denom                                             # [TB, 128] f32


def _choose_tiling(batch, max_tile):
    """Pick (TB, n_tiles, B_pad).

    * Rows padded to a multiple of 16 (bf16 packs 16 sublanes per vreg).
    * Once there is enough work (>=1024 rows), force an even tile count by
      shrinking TB rather than padding an extra tile, so v7x's two TensorCores
      split the 'parallel' grid axis evenly with no wasted compute.
    """
    b16 = -(-batch // 16) * 16
    n = max(1, -(-b16 // max_tile))
    if b16 >= 1024 and n % 2 == 1:
        n += 1
    tb = -(-b16 // (16 * n)) * 16        # ceil(b16/n) rounded up to 16
    return tb, n, tb * n


def mnistnet_forward(x_nchw, params, *, batch_tile=2048):
    """params: (w1, b1, w2, b2, w3, b3) with weights stored [in, out] (f32)."""
    w1, b1, w2, b2, w3, b3 = params
    B = x_nchw.shape[0]
    TB, n_tiles, B_pad = _choose_tiling(B, batch_tile)

    # ---- layout plumbing done outside the kernel, in ONE bf16 pad pass ----
    x2d = x_nchw.reshape(B, _IN_F).astype(jnp.bfloat16)                # x.view(-1, 784)
    x2d = jnp.pad(x2d, ((0, B_pad - B), (0, _IN_PAD - _IN_F)))         # batch + K pad merged

    w1p = jnp.pad(w1.astype(jnp.bfloat16), ((0, _IN_PAD - _IN_F), (0, 0)))
    w2p = w2.astype(jnp.bfloat16)
    w3p = jnp.pad(w3.astype(jnp.bfloat16), ((0, 0), (0, _OUT_PAD - _OUT)))
    b1p = b1.astype(jnp.float32)
    b2p = b2.astype(jnp.float32)
    # NOTE: -1e30 padded-lane bias must stay f32 (it overflows bf16/fp16).
    b3p = jnp.pad(b3.astype(jnp.float32), ((0, 0), (0, _OUT_PAD - _OUT)),
                  constant_values=-1e30)

    flops = 2 * B_pad * (_IN_PAD * _H + _H * _H + _H * _OUT_PAD)
    bytes_accessed = (x2d.size * 2 + w1p.size * 2 + w2p.size * 2 + w3p.size * 2
                      + (b1p.size + b2p.size + b3p.size) * 4
                      + B_pad * _OUT_PAD * 4)

    out = pl.pallas_call(
        mnistnet_kernel,
        out_shape=jax.ShapeDtypeStruct((B_pad, _OUT_PAD), jnp.float32),
        grid_spec=pltpu.PrefetchScalarGridSpec(
            num_scalar_prefetch=0,
            grid=(n_tiles,),
            in_specs=[
                pl.BlockSpec((TB, _IN_PAD), lambda i: (i, 0)),          # x tile (pipelined)
                pl.BlockSpec((_IN_PAD, _H), lambda i: (0, 0)),          # w1 (resident)
                pl.BlockSpec((1, _H), lambda i: (0, 0)),                # b1
                pl.BlockSpec((_H, _H), lambda i: (0, 0)),               # w2
                pl.BlockSpec((1, _H), lambda i: (0, 0)),                # b2
                pl.BlockSpec((_H, _OUT_PAD), lambda i: (0, 0)),         # w3
                pl.BlockSpec((1, _OUT_PAD), lambda i: (0, 0)),          # b3
            ],
            out_specs=pl.BlockSpec((TB, _OUT_PAD), lambda i: (i, 0)),
        ),
        compiler_params=pltpu.CompilerParams(
            dimension_semantics=("parallel",),
            vmem_limit_bytes=64 * 1024 * 1024),     # raise scoped default; <= physical on all chips
        cost_estimate=pl.CostEstimate(
            flops=flops,
            transcendentals=B_pad * _OUT_PAD,
            bytes_accessed=bytes_accessed),
    )(x2d, w1p, b1p, w2p, b2p, w3p, b3p)

    return out[:B, :_OUT]


def init_params(key):
    """Deterministic init mimicking torch.nn.Linear (uniform +-1/sqrt(fan_in)).
    Weights stored as [in_features, out_features]."""
    dims = [(_IN_F, _H), (_H, _H), (_H, _OUT)]
    params = []
    keys = jax.random.split(key, 2 * len(dims))
    for i, (fan_in, fan_out) in enumerate(dims):
        bound = 1.0 / (fan_in ** 0.5)
        w = jax.random.uniform(keys[2 * i], (fan_in, fan_out),
                               minval=-bound, maxval=bound, dtype=jnp.float32)
        b = jax.random.uniform(keys[2 * i + 1], (1, fan_out),
                               minval=-bound, maxval=bound, dtype=jnp.float32)
        params.extend([w, b])
    return tuple(params)


if __name__ == "__main__":
    key = jax.random.PRNGKey(0)
    kx, kp = jax.random.split(key)

    # Small batch of MNIST-shaped inputs (NCHW, like PyTorch): [2, 1, 28, 28]
    x = jax.random.normal(kx, (2, 1, 28, 28), dtype=jnp.float32)
    params = init_params(kp)

    y = mnistnet_forward(x, params)
    jax.block_until_ready(y)

    # Sanity: shape and softmax rows sum to ~1 (exact divide -> tight tolerance;
    # residual error is from the bf16 matmuls).
    assert y.shape == (2, 10)
    assert bool(jnp.all(jnp.abs(jnp.sum(y, axis=1) - 1.0) < 2e-3))
    assert bool(jnp.all(y >= 0.0))

    print("KERNEL_OK")
</pallas_src>

<mosaic_0001>
module attributes {stable_mosaic.version = 11 : i64} {
  func.func @mnistnet_kernel(%arg0: i32, %arg1: memref<16x896xbf16, #tpu.memory_space<vmem>>, %arg2: memref<896x512xbf16, #tpu.memory_space<vmem>>, %arg3: memref<1x512xf32, #tpu.memory_space<vmem>>, %arg4: memref<512x512xbf16, #tpu.memory_space<vmem>>, %arg5: memref<1x512xf32, #tpu.memory_space<vmem>>, %arg6: memref<512x128xbf16, #tpu.memory_space<vmem>>, %arg7: memref<1x128xf32, #tpu.memory_space<vmem>>, %arg8: memref<16x128xf32, #tpu.memory_space<vmem>>) attributes {dimension_semantics = [#tpu.dimension_semantics<parallel>], iteration_bounds = array<i64: 1>, scalar_prefetch = 0 : i64, scratch_operands = 0 : i64, tpu.core_type = #tpu.core_type<tc>, window_params = [{transform_indices = @transform_0, window_bounds = array<i64: 16, 896>}, {pipeline_mode = #tpu.pipeline_mode<synchronous>, transform_indices = @transform_1, window_bounds = array<i64: 896, 512>}, {pipeline_mode = #tpu.pipeline_mode<synchronous>, transform_indices = @transform_2, window_bounds = array<i64: 1, 512>}, {pipeline_mode = #tpu.pipeline_mode<synchronous>, transform_indices = @transform_3, window_bounds = array<i64: 512, 512>}, {pipeline_mode = #tpu.pipeline_mode<synchronous>, transform_indices = @transform_4, window_bounds = array<i64: 1, 512>}, {pipeline_mode = #tpu.pipeline_mode<synchronous>, transform_indices = @transform_5, window_bounds = array<i64: 512, 128>}, {pipeline_mode = #tpu.pipeline_mode<synchronous>, transform_indices = @transform_6, window_bounds = array<i64: 1, 128>}, {transform_indices = @transform_7, window_bounds = array<i64: 16, 128>}]} {
    %c0 = arith.constant 0 : index
    %c0_0 = arith.constant 0 : index
    %0 = vector.load %arg1[%c0, %c0_0] : memref<16x896xbf16, #tpu.memory_space<vmem>>, vector<16x896xbf16>
    %c0_1 = arith.constant 0 : index
    %c0_2 = arith.constant 0 : index
    %1 = vector.load %arg2[%c0_1, %c0_2] : memref<896x512xbf16, #tpu.memory_space<vmem>>, vector<896x512xbf16>
    %cst = arith.constant dense<0.000000e+00> : vector<16x512xf32>
    %2 = tpu.matmul %0, %1, %cst {dimension_numbers = #tpu.dot_dimension_numbers<[1], [0], [0], [1], [0, 0, 1, 1], [], []>} : vector<16x896xbf16>, vector<896x512xbf16>, vector<16x512xf32> -> vector<16x512xf32>
    %c0_3 = arith.constant 0 : index
    %c0_4 = arith.constant 0 : index
    %3 = vector.load %arg3[%c0_3, %c0_4] : memref<1x512xf32, #tpu.memory_space<vmem>>, vector<1x512xf32>
    %4 = vector.broadcast %3 : vector<1x512xf32> to vector<16x512xf32>
    %5 = arith.addf %2, %4 : vector<16x512xf32>
    %cst_5 = arith.constant 0.000000e+00 : f32
    %6 = vector.broadcast %cst_5 : f32 to vector<16x512xf32>
    %7 = arith.maximumf %5, %6 : vector<16x512xf32>
    %8 = arith.truncf %7 : vector<16x512xf32> to vector<16x512xbf16>
    %c0_6 = arith.constant 0 : index
    %c0_7 = arith.constant 0 : index
    %9 = vector.load %arg4[%c0_6, %c0_7] : memref<512x512xbf16, #tpu.memory_space<vmem>>, vector<512x512xbf16>
    %cst_8 = arith.constant dense<0.000000e+00> : vector<16x512xf32>
    %10 = tpu.matmul %8, %9, %cst_8 {dimension_numbers = #tpu.dot_dimension_numbers<[1], [0], [0], [1], [0, 0, 1, 1], [], []>} : vector<16x512xbf16>, vector<512x512xbf16>, vector<16x512xf32> -> vector<16x512xf32>
    %c0_9 = arith.constant 0 : index
    %c0_10 = arith.constant 0 : index
    %11 = vector.load %arg5[%c0_9, %c0_10] : memref<1x512xf32, #tpu.memory_space<vmem>>, vector<1x512xf32>
    %12 = vector.broadcast %11 : vector<1x512xf32> to vector<16x512xf32>
    %13 = arith.addf %10, %12 : vector<16x512xf32>
    %cst_11 = arith.constant 0.000000e+00 : f32
    %14 = vector.broadcast %cst_11 : f32 to vector<16x512xf32>
    %15 = arith.maximumf %13, %14 : vector<16x512xf32>
    %16 = arith.truncf %15 : vector<16x512xf32> to vector<16x512xbf16>
    %c0_12 = arith.constant 0 : index
    %c0_13 = arith.constant 0 : index
    %17 = vector.load %arg6[%c0_12, %c0_13] : memref<512x128xbf16, #tpu.memory_space<vmem>>, vector<512x128xbf16>
    %cst_14 = arith.constant dense<0.000000e+00> : vector<16x128xf32>
    %18 = tpu.matmul %16, %17, %cst_14 {dimension_numbers = #tpu.dot_dimension_numbers<[1], [0], [0], [1], [0, 0, 1, 1], [], []>} : vector<16x512xbf16>, vector<512x128xbf16>, vector<16x128xf32> -> vector<16x128xf32>
    %c0_15 = arith.constant 0 : index
    %c0_16 = arith.constant 0 : index
    %19 = vector.load %arg7[%c0_15, %c0_16] : memref<1x128xf32, #tpu.memory_space<vmem>>, vector<1x128xf32>
    %20 = vector.broadcast %19 : vector<1x128xf32> to vector<16x128xf32>
    %21 = arith.addf %18, %20 : vector<16x128xf32>
    %cst_17 = arith.constant dense<0xFF800000> : vector<16xf32>
    %22 = vector.multi_reduction <maximumf>, %21, %cst_17 [1] : vector<16x128xf32> to vector<16xf32>
    %23 = vector.shape_cast %22 : vector<16xf32> to vector<16x1xf32>
    %24 = vector.broadcast %23 : vector<16x1xf32> to vector<16x128xf32>
    %25 = arith.subf %21, %24 : vector<16x128xf32>
    %26 = math.exp %25 : vector<16x128xf32>
    %cst_18 = arith.constant dense<0.000000e+00> : vector<16xf32>
    %27 = vector.multi_reduction <add>, %26, %cst_18 [1] : vector<16x128xf32> to vector<16xf32>
    %28 = vector.shape_cast %27 : vector<16xf32> to vector<16x1xf32>
    %29 = vector.broadcast %28 : vector<16x1xf32> to vector<16x128xf32>
    %30 = arith.divf %26, %29 : vector<16x128xf32>
    %c0_19 = arith.constant 0 : index
    %c0_20 = arith.constant 0 : index
    %31 = vector.load %arg8[%c0_19, %c0_20] : memref<16x128xf32, #tpu.memory_space<vmem>>, vector<16x128xf32>
    tpu.vector_store %arg8[%c0_19, %c0_20], %30 {strides = array<i32>} : memref<16x128xf32, #tpu.memory_space<vmem>>, vector<16x128xf32>,
    return
  }
  func.func @transform_0(%arg0: i32) -> (i32, i32) {
    %c0_i32 = arith.constant 0 : i32
    %c0_i32_0 = arith.constant 0 : i32
    return %arg0, %c0_i32 : i32, i32
  }
  func.func @transform_1(%arg0: i32) -> (i32, i32) {
    %c0_i32 = arith.constant 0 : i32
    %c0_i32_0 = arith.constant 0 : i32
    %c0_i32_1 = arith.constant 0 : i32
    return %c0_i32, %c0_i32_0 : i32, i32
  }
  func.func @transform_2(%arg0: i32) -> (i32, i32) {
    %c0_i32 = arith.constant 0 : i32
    %c0_i32_0 = arith.constant 0 : i32
    %c0_i32_1 = arith.constant 0 : i32
    return %c0_i32, %c0_i32_0 : i32, i32
  }
  func.func @transform_3(%arg0: i32) -> (i32, i32) {
    %c0_i32 = arith.constant 0 : i32
    %c0_i32_0 = arith.constant 0 : i32
    %c0_i32_1 = arith.constant 0 : i32
    return %c0_i32, %c0_i32_0 : i32, i32
  }
  func.func @transform_4(%arg0: i32) -> (i32, i32) {
    %c0_i32 = arith.constant 0 : i32
    %c0_i32_0 = arith.constant 0 : i32
    %c0_i32_1 = arith.constant 0 : i32
    return %c0_i32, %c0_i32_0 : i32, i32
  }
  func.func @transform_5(%arg0: i32) -> (i32, i32) {
    %c0_i32 = arith.constant 0 : i32
    %c0_i32_0 = arith.constant 0 : i32
    %c0_i32_1 = arith.constant 0 : i32
    return %c0_i32, %c0_i32_0 : i32, i32
  }
  func.func @transform_6(%arg0: i32) -> (i32, i32) {
    %c0_i32 = arith.constant 0 : i32
    %c0_i32_0 = arith.constant 0 : i32
    %c0_i32_1 = arith.constant 0 : i32
    return %c0_i32, %c0_i32_0 : i32, i32
  }
  func.func @transform_7(%arg0: i32) -> (i32, i32) {
    %c0_i32 = arith.constant 0 : i32
    %c0_i32_0 = arith.constant 0 : i32
    return %arg0, %c0_i32 : i32, i32
  }
}

</mosaic_0001>

<llo_original>
// kernel: tpu_custom_call.1
$region0: #{tpu_custom_call.1}
  #allocation0 [shape = 'u32[]', space=smem, size = 0x4, offset = 0x4, fixed_abs, tag = 'smem constant byte address 0x4 - core index']
  #allocation1 [shape = 'u32[144,128]{1,0:T(1,128)}', space=vmem, size = 0x12000, scoped, tag = 'internal scratch']
  %s0 = inlined_call_operand.hbm [shape: bf16[16,896], index: 0, kind: input, shape index: {}]
  %s1 = inlined_call_operand.hbm [shape: bf16[896,512], index: 1, kind: input, shape index: {}]
  %s2 = inlined_call_operand.hbm [shape: f32[1,512], index: 2, kind: input, shape index: {}]
  %s3 = inlined_call_operand.hbm [shape: bf16[512,512], index: 3, kind: input, shape index: {}]
  %s4 = inlined_call_operand.hbm [shape: f32[1,512], index: 4, kind: input, shape index: {}]
  %s5 = inlined_call_operand.hbm [shape: bf16[512,128], index: 5, kind: input, shape index: {}]
  %s6 = inlined_call_operand.hbm [shape: f32[1,128], index: 6, kind: input, shape index: {}]
  %s7 = inlined_call_operand.hbm [shape: f32[16,128], index: 7, kind: output, shape index: {}]
  %s8 = sld [smem:[#allocation0]]
  $region66: #{tpu_custom_call.1} parent=0
    _
  %s10 = ssub.s32 1, %s8
  %s11 = scalar_select 0, %s10, %s8
  $region1: #{tpu_custom_call.1} parent=0
    #allocation2 [shape = 'u8[28672]{0}', space=vmem, size = 0x7000, scoped, tag = 'input window, operand 0, single buffered']
    #allocation3 [shape = 's32[1]{0}', space=sflag, size = 0x4, scoped, tag = 'scoped memory for tpu_custom_call.1']
    #allocation4 [shape = 's32[1]{0}', space=sflag, size = 0x4, scoped, tag = 'scoped memory for tpu_custom_call.1']
    #allocation5 [shape = 'u8[917504]{0}', space=vmem, size = 0xe0000, scoped, tag = 'input window, operand 1, single buffered']
    #allocation6 [shape = 's32[1]{0}', space=sflag, size = 0x4, scoped, tag = 'scoped memory for tpu_custom_call.1']
    #allocation7 [shape = 'u8[2048]{0}', space=vmem, size = 0x800, scoped, tag = 'input window, operand 2, single buffered']
    #allocation8 [shape = 'u8[524288]{0}', space=vmem, size = 0x80000, scoped, tag = 'input window, operand 3, single buffered']
    #allocation9 [shape = 's32[1]{0}', space=sflag, size = 0x4, scoped, tag = 'scoped memory for tpu_custom_call.1']
    #allocation10 [shape = 'u8[2048]{0}', space=vmem, size = 0x800, scoped, tag = 'input window, operand 4, single buffered']
    #allocation11 [shape = 'u8[131072]{0}', space=vmem, size = 0x20000, scoped, tag = 'input window, operand 5, single buffered']
    #allocation12 [shape = 's32[1]{0}', space=sflag, size = 0x4, scoped, tag = 'scoped memory for tpu_custom_call.1']
    #allocation13 [shape = 'u8[512]{0}', space=vmem, size = 0x400, scoped, tag = 'input window, operand 6, single buffered']
    #allocation14 [shape = 'u8[8192]{0}', space=vmem, size = 0x2000, scoped, tag = 'output window, operand 0, single buffered']
    %12 = vsyncpa [#allocation3], 0
    %13 = vsyncpa [#allocation6], 0
    %14 = vsyncpa [#allocation9], 0
    %15 = vsyncpa [#allocation12], 0
    %16 = vsyncpa [#allocation4], 0
    // Predicated region
    $region2: #{tpu_custom_call.1} parent=1 // pred_check
      _
    $region3: #{tpu_custom_call.1} parent=1 // pred_check_branch
      %18 = sbr.rel (0) target = $region5
    $region4: #{tpu_custom_call.1} parent=1 // pred_region
      %s20 = ssub.s32 896, 896
      %21 = vsyncadd [#allocation3], %s20
      %s22 = sshll.u32 [#allocation2], 4
      %s23 = int_to_ptr.vmem [resolvable:$true] %s22
      %28 = dma.hbm_to_vmem [thread:$0]  %s0, 896, %s23, [#allocation3], 448, 448, 28
    $region5: #{tpu_custom_call.1} parent=1 // pred_fallthru
      _
    // Predicated region
    $region6: #{tpu_custom_call.1} parent=1 // pred_check
      _
    $region7: #{tpu_custom_call.1} parent=1 // pred_check_branch
      %30 = sbr.rel (0) target = $region9
    $region8: #{tpu_custom_call.1} parent=1 // pred_region
      %s32 = ssub.s32 28672, 28672
      %33 = vsyncadd [#allocation6], %s32
      %s34 = sshll.u32 [#allocation5], 4
      %s35 = int_to_ptr.vmem [resolvable:$true] %s34
      %40 = dma.hbm_to_vmem [thread:$0]  %s1, 28672, %s35, [#allocation6], 256, 256, 16
    $region9: #{tpu_custom_call.1} parent=1 // pred_fallthru
      _
    // Predicated region
    $region10: #{tpu_custom_call.1} parent=1 // pred_check
      _
    $region11: #{tpu_custom_call.1} parent=1 // pred_check_branch
      %42 = sbr.rel (0) target = $region13
    $region12: #{tpu_custom_call.1} parent=1 // pred_region
      %s44 = ssub.s32 64, 64
      %45 = vsyncadd [#allocation6], %s44
      %s47 = sshll.u32 [#allocation7], 4
      %s48 = int_to_ptr.vmem [resolvable:$true] %s47
      %50 = dma.hbm_to_vmem [thread:$0]  %s2, 64, %s48, [#allocation6]
    $region13: #{tpu_custom_call.1} parent=1 // pred_fallthru
      _
    // Predicated region
    $region14: #{tpu_custom_call.1} parent=1 // pred_check
      _
    $region15: #{tpu_custom_call.1} parent=1 // pred_check_branch
      %52 = sbr.rel (0) target = $region17
    $region16: #{tpu_custom_call.1} parent=1 // pred_region
      %s54 = ssub.s32 16384, 16384
      %55 = vsyncadd [#allocation9], %s54
      %s56 = sshll.u32 [#allocation8], 4
      %s57 = int_to_ptr.vmem [resolvable:$true] %s56
      %62 = dma.hbm_to_vmem [thread:$0]  %s3, 16384, %s57, [#allocation9], 256, 256, 16
    $region17: #{tpu_custom_call.1} parent=1 // pred_fallthru
      _
    // Predicated region
    $region18: #{tpu_custom_call.1} parent=1 // pred_check
      _
    $region19: #{tpu_custom_call.1} parent=1 // pred_check_branch
      %64 = sbr.rel (0) target = $region21
    $region20: #{tpu_custom_call.1} parent=1 // pred_region
      %s66 = ssub.s32 64, 64
      %67 = vsyncadd [#allocation9], %s66
      %s69 = sshll.u32 [#allocation10], 4
      %s70 = int_to_ptr.vmem [resolvable:$true] %s69
      %72 = dma.hbm_to_vmem [thread:$0]  %s4, 64, %s70, [#allocation9]
    $region21: #{tpu_custom_call.1} parent=1 // pred_fallthru
      _
    // Predicated region
    $region22: #{tpu_custom_call.1} parent=1 // pred_check
      _
    $region23: #{tpu_custom_call.1} parent=1 // pred_check_branch
      %74 = sbr.rel (0) target = $region25
    $region24: #{tpu_custom_call.1} parent=1 // pred_region
      %s76 = ssub.s32 4096, 4096
      %77 = vsyncadd [#allocation12], %s76
      %s78 = sshll.u32 [#allocation11], 4
      %s79 = int_to_ptr.vmem [resolvable:$true] %s78
      %84 = dma.hbm_to_vmem [thread:$0]  %s5, 4096, %s79, [#allocation12], 64, 64, 4
    $region25: #{tpu_custom_call.1} parent=1 // pred_fallthru
      _
    // Predicated region
    $region26: #{tpu_custom_call.1} parent=1 // pred_check
      _
    $region27: #{tpu_custom_call.1} parent=1 // pred_check_branch
      %86 = sbr.rel (0) target = $region29
    $region28: #{tpu_custom_call.1} parent=1 // pred_region
      %s88 = ssub.s32 16, 16
      %89 = vsyncadd [#allocation12], %s88
      %s91 = sshll.u32 [#allocation13], 4
      %s92 = int_to_ptr.vmem [resolvable:$true] %s91
      %94 = dma.hbm_to_vmem [thread:$0]  %s6, 16, %s92, [#allocation12]
    $region29: #{tpu_custom_call.1} parent=1 // pred_fallthru
      _
    // Predicated region
    $region30: #{tpu_custom_call.1} parent=1 // pred_check
      _
    $region31: #{tpu_custom_call.1} parent=1 // pred_check_branch
      %96 = sbr.rel (0) target = $region33
    $region32: #{tpu_custom_call.1} parent=1 // pred_region
      %97 = dma.done [#allocation3], 896
    $region33: #{tpu_custom_call.1} parent=1 // pred_fallthru
      _
    // Predicated region
    $region34: #{tpu_custom_call.1} parent=1 // pred_check
      _
    $region35: #{tpu_custom_call.1} parent=1 // pred_check_branch
      %99 = sbr.rel (0) target = $region37
    $region36: #{tpu_custom_call.1} parent=1 // pred_region
      %100 = dma.done [#allocation6], 28672
    $region37: #{tpu_custom_call.1} parent=1 // pred_fallthru
      _
    // Predicated region
    $region38: #{tpu_custom_call.1} parent=1 // pred_check
      _
    $region39: #{tpu_custom_call.1} parent=1 // pred_check_branch
      %102 = sbr.rel (0) target = $region41
    $region40: #{tpu_custom_call.1} parent=1 // pred_region
      %103 = dma.done [#allocation6], 64
    $region41: #{tpu_custom_call.1} parent=1 // pred_fallthru
      _
    // Predicated region
    $region42: #{tpu_custom_call.1} parent=1 // pred_check
      _
    $region43: #{tpu_custom_call.1} parent=1 // pred_check_branch
      %105 = sbr.rel (0) target = $region45
    $region44: #{tpu_custom_call.1} parent=1 // pred_region
      %106 = dma.done [#allocation9], 16384
    $region45: #{tpu_custom_call.1} parent=1 // pred_fallthru
      _
    // Predicated region
    $region46: #{tpu_custom_call.1} parent=1 // pred_check
      _
    $region47: #{tpu_custom_call.1} parent=1 // pred_check_branch
      %108 = sbr.rel (0) target = $region49
    $region48: #{tpu_custom_call.1} parent=1 // pred_region
      %109 = dma.done [#allocation9], 64
    $region49: #{tpu_custom_call.1} parent=1 // pred_fallthru
      _
    // Predicated region
    $region50: #{tpu_custom_call.1} parent=1 // pred_check
      _
    $region51: #{tpu_custom_call.1} parent=1 // pred_check_branch
      %111 = sbr.rel (0) target = $region53
    $region52: #{tpu_custom_call.1} parent=1 // pred_region
      %112 = dma.done [#allocation12], 4096
    $region53: #{tpu_custom_call.1} parent=1 // pred_fallthru
      _
    // Predicated region
    $region54: #{tpu_custom_call.1} parent=1 // pred_check
      _
    $region55: #{tpu_custom_call.1} parent=1 // pred_check_branch
      %114 = sbr.rel (0) target = $region57
    $region56: #{tpu_custom_call.1} parent=1 // pred_region
      %115 = dma.done [#allocation12], 16
    $region57: #{tpu_custom_call.1} parent=1 // pred_fallthru
      _
    %v117 = vld [vmem:[#allocation2] sm:$0xff]
    %v118 = vld [vmem:[#allocation2 + $0x8] sm:$0xff]
    %v119 = vld [vmem:[#allocation2 + $0x10] sm:$0xff]
    %v120 = vld [vmem:[#allocation2 + $0x18] sm:$0xf]
    %v121 = vld [vmem:[#allocation2 + $0x1c] sm:$0xff]
    %v122 = vld [vmem:[#allocation2 + $0x24] sm:$0xff]
    %v123 = vld [vmem:[#allocation2 + $0x2c] sm:$0xff]
    %v124 = vld [vmem:[#allocation2 + $0x34] sm:$0xf]
    %v125 = vld [vmem:[#allocation5] sm:$0xff]
    %v126 = vld [vmem:[#allocation5 + $0x8] sm:$0xff]
    %v127 = vld [vmem:[#allocation5 + $0x10] sm:$0xff]
    %v128 = vld [vmem:[#allocation5 + $0x18] sm:$0xff]
    %v129 = vld [vmem:[#allocation5 + $0x20] sm:$0xff]
    %v130 = vld [vmem:[#allocation5 + $0x28] sm:$0xff]
    %v131 = vld [vmem:[#allocation5 + $0x30] sm:$0xff]
    %v132 = vld [vmem:[#allocation5 + $0x38] sm:$0xff]
    %v133 = vld [vmem:[#allocation5 + $0x40] sm:$0xff]
    %v134 = vld [vmem:[#allocation5 + $0x48] sm:$0xff]
    %v135 = vld [vmem:[#allocation5 + $0x50] sm:$0xff]
    %v136 = vld [vmem:[#allocation5 + $0x58] sm:$0xff]
    %v137 = vld [vmem:[#allocation5 + $0x60] sm:$0xff]
    %v138 = vld [vmem:[#allocation5 + $0x68] sm:$0xff]
    %v139 = vld [vmem:[#allocation5 + $0x70] sm:$0xff]
    %v140 = vld [vmem:[#allocation5 + $0x78] sm:$0xff]
    %v141 = vld [vmem:[#allocation5 + $0x80] sm:$0xff]
    %v142 = vld [vmem:[#allocation5 + $0x88] sm:$0xff]
    %v143 = vld [vmem:[#allocation5 + $0x90] sm:$0xff]
    %v144 = vld [vmem:[#allocation5 + $0x98] sm:$0xff]
    %v145 = vld [vmem:[#allocation5 + $0xa0] sm:$0xff]
    %v146 = vld [vmem:[#allocation5 + $0xa8] sm:$0xff]
    %v147 = vld [vmem:[#allocation5 + $0xb0] sm:$0xff]
    %v148 = vld [vmem:[#allocation5 + $0xb8] sm:$0xff]
    %v149 = vld [vmem:[#allocation5 + $0xc0] sm:$0xff]
    %v150 = vld [vmem:[#allocation5 + $0xc8] sm:$0xff]
    %v151 = vld [vmem:[#allocation5 + $0xd0] sm:$0xff]
    %v152 = vld [vmem:[#allocation5 + $0xd8] sm:$0xff]
    %v153 = vld [vmem:[#allocation5 + $0xe0] sm:$0xff]
    %v154 = vld [vmem:[#allocation5 + $0xe8] sm:$0xff]
    %v155 = vld [vmem:[#allocation5 + $0xf0] sm:$0xff]
    %v156 = vld [vmem:[#allocation5 + $0xf8] sm:$0xff]
    %v157 = vld [vmem:[#allocation5 + $0x100] sm:$0xff]
    %v158 = vld [vmem:[#allocation5 + $0x108] sm:$0xff]
    %v159 = vld [vmem:[#allocation5 + $0x110] sm:$0xff]
    %v160 = vld [vmem:[#allocation5 + $0x118] sm:$0xff]
    %v161 = vld [vmem:[#allocation5 + $0x120] sm:$0xff]
    %v162 = vld [vmem:[#allocation5 + $0x128] sm:$0xff]
    %v163 = vld [vmem:[#allocation5 + $0x130] sm:$0xff]
    %v164 = vld [vmem:[#allocation5 + $0x138] sm:$0xff]
    %v165 = vld [vmem:[#allocation5 + $0x140] sm:$0xff]
    %v166 = vld [vmem:[#allocation5 + $0x148] sm:$0xff]
    %v167 = vld [vmem:[#allocation5 + $0x150] sm:$0xff]
    %v168 = vld [vmem:[#allocation5 + $0x158] sm:$0xff]
    %v169 = vld [vmem:[#allocation5 + $0x160] sm:$0xff]
    %v170 = vld [vmem:[#allocation5 + $0x168] sm:$0xff]
    %v171 = vld [vmem:[#allocation5 + $0x170] sm:$0xff]
    %v172 = vld [vmem:[#allocation5 + $0x178] sm:$0xff]
    %v173 = vld [vmem:[#allocation5 + $0x180] sm:$0xff]
    %v174 = vld [vmem:[#allocation5 + $0x188] sm:$0xff]
    %v175 = vld [vmem:[#allocation5 + $0x190] sm:$0xff]
    %v176 = vld [vmem:[#allocation5 + $0x198] sm:$0xff]
    %v177 = vld [vmem:[#allocation5 + $0x1a0] sm:$0xff]
    %v178 = vld [vmem:[#allocation5 + $0x1a8] sm:$0xff]
    %v179 = vld [vmem:[#allocation5 + $0x1b0] sm:$0xff]
    %v180 = vld [vmem:[#allocation5 + $0x1b8] sm:$0xff]
    %v181 = vld [vmem:[#allocation5 + $0x1c0] sm:$0xff]
    %v182 = vld [vmem:[#allocation5 + $0x1c8] sm:$0xff]
    %v183 = vld [vmem:[#allocation5 + $0x1d0] sm:$0xff]
    %v184 = vld [vmem:[#allocation5 + $0x1d8] sm:$0xff]
    %v185 = vld [vmem:[#allocation5 + $0x1e0] sm:$0xff]
    %v186 = vld [vmem:[#allocation5 + $0x1e8] sm:$0xff]
    %v187 = vld [vmem:[#allocation5 + $0x1f0] sm:$0xff]
    %v188 = vld [vmem:[#allocation5 + $0x1f8] sm:$0xff]
    %v189 = vld [vmem:[#allocation5 + $0x200] sm:$0xff]
    %v190 = vld [vmem:[#allocation5 + $0x208] sm:$0xff]
    %v191 = vld [vmem:[#allocation5 + $0x210] sm:$0xff]
    %v192 = vld [vmem:[#allocation5 + $0x218] sm:$0xff]
    %v193 = vld [vmem:[#allocation5 + $0x220] sm:$0xff]
    %v194 = vld [vmem:[#allocation5 + $0x228] sm:$0xff]
    %v195 = vld [vmem:[#allocation5 + $0x230] sm:$0xff]
    %v196 = vld [vmem:[#allocation5 + $0x238] sm:$0xff]
    %v197 = vld [vmem:[#allocation5 + $0x240] sm:$0xff]
    %v198 = vld [vmem:[#allocation5 + $0x248] sm:$0xff]
    %v199 = vld [vmem:[#allocation5 + $0x250] sm:$0xff]
    %v200 = vld [vmem:[#allocation5 + $0x258] sm:$0xff]
    %v201 = vld [vmem:[#allocation5 + $0x260] sm:$0xff]
    %v202 = vld [vmem:[#allocation5 + $0x268] sm:$0xff]
    %v203 = vld [vmem:[#allocation5 + $0x270] sm:$0xff]
    %v204 = vld [vmem:[#allocation5 + $0x278] sm:$0xff]
    %v205 = vld [vmem:[#allocation5 + $0x280] sm:$0xff]
    %v206 = vld [vmem:[#allocation5 + $0x288] sm:$0xff]
    %v207 = vld [vmem:[#allocation5 + $0x290] sm:$0xff]
    %v208 = vld [vmem:[#allocation5 + $0x298] sm:$0xff]
    %v209 = vld [vmem:[#allocation5 + $0x2a0] sm:$0xff]
    %v210 = vld [vmem:[#allocation5 + $0x2a8] sm:$0xff]
    %v211 = vld [vmem:[#allocation5 + $0x2b0] sm:$0xff]
    %v212 = vld [vmem:[#allocation5 + $0x2b8] sm:$0xff]
    %v213 = vld [vmem:[#allocation5 + $0x2c0] sm:$0xff]
    %v214 = vld [vmem:[#allocation5 + $0x2c8] sm:$0xff]
    %v215 = vld [vmem:[#allocation5 + $0x2d0] sm:$0xff]
    %v216 = vld [vmem:[#allocation5 + $0x2d8] sm:$0xff]
    %v217 = vld [vmem:[#allocation5 + $0x2e0] sm:$0xff]
    %v218 = vld [vmem:[#allocation5 + $0x2e8] sm:$0xff]
    %v219 = vld [vmem:[#allocation5 + $0x2f0] sm:$0xff]
    %v220 = vld [vmem:[#allocation5 + $0x2f8] sm:$0xff]
    %v221 = vld [vmem:[#allocation5 + $0x300] sm:$0xff]
    %v222 = vld [vmem:[#allocation5 + $0x308] sm:$0xff]
    %v223 = vld [vmem:[#allocation5 + $0x310] sm:$0xff]
    %v224 = vld [vmem:[#allocation5 + $0x318] sm:$0xff]
    %v225 = vld [vmem:[#allocation5 + $0x320] sm:$0xff]
    %v226 = vld [vmem:[#allocation5 + $0x328] sm:$0xff]
    %v227 = vld [vmem:[#allocation5 + $0x330] sm:$0xff]
    %v228 = vld [vmem:[#allocation5 + $0x338] sm:$0xff]
    %v229 = vld [vmem:[#allocation5 + $0x340] sm:$0xff]
    %v230 = vld [vmem:[#allocation5 + $0x348] sm:$0xff]
    %v231 = vld [vmem:[#allocation5 + $0x350] sm:$0xff]
    %v232 = vld [vmem:[#allocation5 + $0x358] sm:$0xff]
    %v233 = vld [vmem:[#allocation5 + $0x360] sm:$0xff]
    %v234 = vld [vmem:[#allocation5 + $0x368] sm:$0xff]
    %v235 = vld [vmem:[#allocation5 + $0x370] sm:$0xff]
    %v236 = vld [vmem:[#allocation5 + $0x378] sm:$0xff]
    %v237 = vld [vmem:[#allocation5 + $0x380] sm:$0xff]
    %v238 = vld [vmem:[#allocation5 + $0x388] sm:$0xff]
    %v239 = vld [vmem:[#allocation5 + $0x390] sm:$0xff]
    %v240 = vld [vmem:[#allocation5 + $0x398] sm:$0xff]
    %v241 = vld [vmem:[#allocation5 + $0x3a0] sm:$0xff]
    %v242 = vld [vmem:[#allocation5 + $0x3a8] sm:$0xff]
    %v243 = vld [vmem:[#allocation5 + $0x3b0] sm:$0xff]
    %v244 = vld [vmem:[#allocation5 + $0x3b8] sm:$0xff]
    %v245 = vld [vmem:[#allocation5 + $0x3c0] sm:$0xff]
    %v246 = vld [vmem:[#allocation5 + $0x3c8] sm:$0xff]
    %v247 = vld [vmem:[#allocation5 + $0x3d0] sm:$0xff]
    %v248 = vld [vmem:[#allocation5 + $0x3d8] sm:$0xff]
    %v249 = vld [vmem:[#allocation5 + $0x3e0] sm:$0xff]
    %v250 = vld [vmem:[#allocation5 + $0x3e8] sm:$0xff]
    %v251 = vld [vmem:[#allocation5 + $0x3f0] sm:$0xff]
    %v252 = vld [vmem:[#allocation5 + $0x3f8] sm:$0xff]
    %v253 = vld [vmem:[#allocation5 + $0x400] sm:$0xff]
    %v254 = vld [vmem:[#allocation5 + $0x408] sm:$0xff]
    %v255 = vld [vmem:[#allocation5 + $0x410] sm:$0xff]
    %v256 = vld [vmem:[#allocation5 + $0x418] sm:$0xff]
    %v257 = vld [vmem:[#allocation5 + $0x420] sm:$0xff]
    %v258 = vld [vmem:[#allocation5 + $0x428] sm:$0xff]
    %v259 = vld [vmem:[#allocation5 + $0x430] sm:$0xff]
    %v260 = vld [vmem:[#allocation5 + $0x438] sm:$0xff]
    %v261 = vld [vmem:[#allocation5 + $0x440] sm:$0xff]
    %v262 = vld [vmem:[#allocation5 + $0x448] sm:$0xff]
    %v263 = vld [vmem:[#allocation5 + $0x450] sm:$0xff]
    %v264 = vld [vmem:[#allocation5 + $0x458] sm:$0xff]
    %v265 = vld [vmem:[#allocation5 + $0x460] sm:$0xff]
    %v266 = vld [vmem:[#allocation5 + $0x468] sm:$0xff]
    %v267 = vld [vmem:[#allocation5 + $0x470] sm:$0xff]
    %v268 = vld [vmem:[#allocation5 + $0x478] sm:$0xff]
    %v269 = vld [vmem:[#allocation5 + $0x480] sm:$0xff]
    %v270 = vld [vmem:[#allocation5 + $0x488] sm:$0xff]
    %v271 = vld [vmem:[#allocation5 + $0x490] sm:$0xff]
    %v272 = vld [vmem:[#allocation5 + $0x498] sm:$0xff]
    %v273 = vld [vmem:[#allocation5 + $0x4a0] sm:$0xff]
    %v274 = vld [vmem:[#allocation5 + $0x4a8] sm:$0xff]
    %v275 = vld [vmem:[#allocation5 + $0x4b0] sm:$0xff]
    %v276 = vld [vmem:[#allocation5 + $0x4b8] sm:$0xff]
    %v277 = vld [vmem:[#allocation5 + $0x4c0] sm:$0xff]
    %v278 = vld [vmem:[#allocation5 + $0x4c8] sm:$0xff]
    %v279 = vld [vmem:[#allocation5 + $0x4d0] sm:$0xff]
    %v280 = vld [vmem:[#allocation5 + $0x4d8] sm:$0xff]
    %v281 = vld [vmem:[#allocation5 + $0x4e0] sm:$0xff]
    %v282 = vld [vmem:[#allocation5 + $0x4e8] sm:$0xff]
    %v283 = vld [vmem:[#allocation5 + $0x4f0] sm:$0xff]
    %v284 = vld [vmem:[#allocation5 + $0x4f8] sm:$0xff]
    %v285 = vld [vmem:[#allocation5 + $0x500] sm:$0xff]
    %v286 = vld [vmem:[#allocation5 + $0x508] sm:$0xff]
    %v287 = vld [vmem:[#allocation5 + $0x510] sm:$0xff]
    %v288 = vld [vmem:[#allocation5 + $0x518] sm:$0xff]
    %v289 = vld [vmem:[#allocation5 + $0x520] sm:$0xff]
    %v290 = vld [vmem:[#allocation5 + $0x528] sm:$0xff]
    %v291 = vld [vmem:[#allocation5 + $0x530] sm:$0xff]
    %v292 = vld [vmem:[#allocation5 + $0x538] sm:$0xff]
    %v293 = vld [vmem:[#allocation5 + $0x540] sm:$0xff]
    %v294 = vld [vmem:[#allocation5 + $0x548] sm:$0xff]
    %v295 = vld [vmem:[#allocation5 + $0x550] sm:$0xff]
    %v296 = vld [vmem:[#allocation5 + $0x558] sm:$0xff]
    %v297 = vld [vmem:[#allocation5 + $0x560] sm:$0xff]
    %v298 = vld [vmem:[#allocation5 + $0x568] sm:$0xff]
    %v299 = vld [vmem:[#allocation5 + $0x570] sm:$0xff]
    %v300 = vld [vmem:[#allocation5 + $0x578] sm:$0xff]
    %v301 = vld [vmem:[#allocation5 + $0x580] sm:$0xff]
    %v302 = vld [vmem:[#allocation5 + $0x588] sm:$0xff]
    %v303 = vld [vmem:[#allocation5 + $0x590] sm:$0xff]
    %v304 = vld [vmem:[#allocation5 + $0x598] sm:$0xff]
    %v305 = vld [vmem:[#allocation5 + $0x5a0] sm:$0xff]
    %v306 = vld [vmem:[#allocation5 + $0x5a8] sm:$0xff]
    %v307 = vld [vmem:[#allocation5 + $0x5b0] sm:$0xff]
    %v308 = vld [vmem:[#allocation5 + $0x5b8] sm:$0xff]
    %v309 = vld [vmem:[#allocation5 + $0x5c0] sm:$0xff]
    %v310 = vld [vmem:[#allocation5 + $0x5c8] sm:$0xff]
    %v311 = vld [vmem:[#allocation5 + $0x5d0] sm:$0xff]
    %v312 = vld [vmem:[#allocation5 + $0x5d8] sm:$0xff]
    %v313 = vld [vmem:[#allocation5 + $0x5e0] sm:$0xff]
    %v314 = vld [vmem:[#allocation5 + $0x5e8] sm:$0xff]
    %v315 = vld [vmem:[#allocation5 + $0x5f0] sm:$0xff]
    %v316 = vld [vmem:[#allocation5 + $0x5f8] sm:$0xff]
    %v317 = vld [vmem:[#allocation5 + $0x600] sm:$0xff]
    %v318 = vld [vmem:[#allocation5 + $0x608] sm:$0xff]
    %v319 = vld [vmem:[#allocation5 + $0x610] sm:$0xff]
    %v320 = vld [vmem:[#allocation5 + $0x618] sm:$0xff]
    %v321 = vld [vmem:[#allocation5 + $0x620] sm:$0xff]
    %v322 = vld [vmem:[#allocation5 + $0x628] sm:$0xff]
    %v323 = vld [vmem:[#allocation5 + $0x630] sm:$0xff]
    %v324 = vld [vmem:[#allocation5 + $0x638] sm:$0xff]
    %v325 = vld [vmem:[#allocation5 + $0x640] sm:$0xff]
    %v326 = vld [vmem:[#allocation5 + $0x648] sm:$0xff]
    %v327 = vld [vmem:[#allocation5 + $0x650] sm:$0xff]
    %v328 = vld [vmem:[#allocation5 + $0x658] sm:$0xff]
    %v329 = vld [vmem:[#allocation5 + $0x660] sm:$0xff]
    %v330 = vld [vmem:[#allocation5 + $0x668] sm:$0xff]
    %v331 = vld [vmem:[#allocation5 + $0x670] sm:$0xff]
    %v332 = vld [vmem:[#allocation5 + $0x678] sm:$0xff]
    %v333 = vld [vmem:[#allocation5 + $0x680] sm:$0xff]
    %v334 = vld [vmem:[#allocation5 + $0x688] sm:$0xff]
    %v335 = vld [vmem:[#allocation5 + $0x690] sm:$0xff]
    %v336 = vld [vmem:[#allocation5 + $0x698] sm:$0xff]
    %v337 = vld [vmem:[#allocation5 + $0x6a0] sm:$0xff]
    %v338 = vld [vmem:[#allocation5 + $0x6a8] sm:$0xff]
    %v339 = vld [vmem:[#allocation5 + $0x6b0] sm:$0xff]
    %v340 = vld [vmem:[#allocation5 + $0x6b8] sm:$0xff]
    %v341 = vld [vmem:[#allocation5 + $0x6c0] sm:$0xff]
    %v342 = vld [vmem:[#allocation5 + $0x6c8] sm:$0xff]
    %v343 = vld [vmem:[#allocation5 + $0x6d0] sm:$0xff]
    %v344 = vld [vmem:[#allocation5 + $0x6d8] sm:$0xff]
    %v345 = vld [vmem:[#allocation5 + $0x6e0] sm:$0xff]
    %v346 = vld [vmem:[#allocation5 + $0x6e8] sm:$0xff]
    %v347 = vld [vmem:[#allocation5 + $0x6f0] sm:$0xff]
    %v348 = vld [vmem:[#allocation5 + $0x6f8] sm:$0xff]
    %v349 = vld [vmem:[#allocation7] sm:$0xf]
    %v351 = vlaneseq
    %v352 = vshrl.u32 %v351, 7
    %v353 = vsub.s32 0, %v352
    %v354 = vrot.slane %v349, %v353
    %v355 = vlaneseq
    %v356 = vshrl.u32 %v355, 7
    %v357 = vsub.s32 1, %v356
    %v358 = vrot.slane %v349, %v357
    %v359 = vlaneseq
    %v360 = vshrl.u32 %v359, 7
    %v361 = vsub.s32 2, %v360
    %v362 = vrot.slane %v349, %v361
    %v363 = vlaneseq
    %v364 = vshrl.u32 %v363, 7
    %v365 = vsub.s32 3, %v364
    %v366 = vrot.slane %v349, %v365
    %v379 = vunpack.c.l.b16 %v117
    %v380 = vunpack.c.h.b16 %v117
    %v381 = vunpack.c.l.b16 %v118
    %v382 = vunpack.c.h.b16 %v118
    %v383 = vunpack.c.l.b16 %v119
    %v384 = vunpack.c.h.b16 %v119
    %v385 = vunpack.c.l.b16 %v120
    %v386 = vunpack.c.l.b16 %v121
    %v387 = vunpack.c.h.b16 %v121
    %v388 = vunpack.c.l.b16 %v122
    %v389 = vunpack.c.h.b16 %v122
    %v390 = vunpack.c.l.b16 %v123
    %v391 = vunpack.c.h.b16 %v123
    %v392 = vunpack.c.l.b16 %v124
    %v393 = vpack.c.b16 %v386, %v379
    %v394 = vpack.c.b16 %v387, %v380
    %v395 = vpack.c.b16 %v388, %v381
    %v396 = vpack.c.b16 %v389, %v382
    %v397 = vpack.c.b16 %v390, %v383
    %v398 = vpack.c.b16 %v391, %v384
    %v399 = vpack.c.b16 %v392, %v385
    %v631 = vunpack.c.l.b16 %v125
    %v632 = vunpack.c.h.b16 %v125
    %v633 = vunpack.c.l.b16 %v126
    %v634 = vunpack.c.h.b16 %v126
    %v635 = vunpack.c.l.b16 %v127
    %v636 = vunpack.c.h.b16 %v127
    %v637 = vunpack.c.l.b16 %v128
    %v638 = vunpack.c.h.b16 %v128
    %v639 = vunpack.c.l.b16 %v129
    %v640 = vunpack.c.h.b16 %v129
    %v641 = vunpack.c.l.b16 %v130
    %v642 = vunpack.c.h.b16 %v130
    %v643 = vunpack.c.l.b16 %v131
    %v644 = vunpack.c.h.b16 %v131
    %v645 = vunpack.c.l.b16 %v132
    %v646 = vunpack.c.h.b16 %v132
    %v647 = vunpack.c.l.b16 %v133
    %v648 = vunpack.c.h.b16 %v133
    %v649 = vunpack.c.l.b16 %v134
    %v650 = vunpack.c.h.b16 %v134
    %v651 = vunpack.c.l.b16 %v135
    %v652 = vunpack.c.h.b16 %v135
    %v653 = vunpack.c.l.b16 %v136
    %v654 = vunpack.c.h.b16 %v136
    %v655 = vunpack.c.l.b16 %v137
    %v656 = vunpack.c.h.b16 %v137
    %v657 = vunpack.c.l.b16 %v138
    %v658 = vunpack.c.h.b16 %v138
    %v659 = vunpack.c.l.b16 %v139
    %v660 = vunpack.c.h.b16 %v139
    %v661 = vunpack.c.l.b16 %v140
    %v662 = vunpack.c.h.b16 %v140
    %v663 = vunpack.c.l.b16 %v141
    %v664 = vunpack.c.h.b16 %v141
    %v665 = vunpack.c.l.b16 %v142
    %v666 = vunpack.c.h.b16 %v142
    %v667 = vunpack.c.l.b16 %v143
    %v668 = vunpack.c.h.b16 %v143
    %v669 = vunpack.c.l.b16 %v144
    %v670 = vunpack.c.h.b16 %v144
    %v671 = vunpack.c.l.b16 %v145
    %v672 = vunpack.c.h.b16 %v145
    %v673 = vunpack.c.l.b16 %v146
    %v674 = vunpack.c.h.b16 %v146
    %v675 = vunpack.c.l.b16 %v147
    %v676 = vunpack.c.h.b16 %v147
    %v677 = vunpack.c.l.b16 %v148
    %v678 = vunpack.c.h.b16 %v148
    %v679 = vunpack.c.l.b16 %v149
    %v680 = vunpack.c.h.b16 %v149
    %v681 = vunpack.c.l.b16 %v150
    %v682 = vunpack.c.h.b16 %v150
    %v683 = vunpack.c.l.b16 %v151
    %v684 = vunpack.c.h.b16 %v151
    %v685 = vunpack.c.l.b16 %v152
    %v686 = vunpack.c.h.b16 %v152
    %v687 = vunpack.c.l.b16 %v153
    %v688 = vunpack.c.h.b16 %v153
    %v689 = vunpack.c.l.b16 %v154
    %v690 = vunpack.c.h.b16 %v154
    %v691 = vunpack.c.l.b16 %v155
    %v692 = vunpack.c.h.b16 %v155
    %v693 = vunpack.c.l.b16 %v156
    %v694 = vunpack.c.h.b16 %v156
    %v695 = vunpack.c.l.b16 %v157
    %v696 = vunpack.c.h.b16 %v157
    %v697 = vunpack.c.l.b16 %v158
    %v698 = vunpack.c.h.b16 %v158
    %v699 = vunpack.c.l.b16 %v159
    %v700 = vunpack.c.h.b16 %v159
    %v701 = vunpack.c.l.b16 %v160
    %v702 = vunpack.c.h.b16 %v160
    %v703 = vunpack.c.l.b16 %v161
    %v704 = vunpack.c.h.b16 %v161
    %v705 = vunpack.c.l.b16 %v162
    %v706 = vunpack.c.h.b16 %v162
    %v707 = vunpack.c.l.b16 %v163
    %v708 = vunpack.c.h.b16 %v163
    %v709 = vunpack.c.l.b16 %v164
    %v710 = vunpack.c.h.b16 %v164
    %v711 = vunpack.c.l.b16 %v165
    %v712 = vunpack.c.h.b16 %v165
    %v713 = vunpack.c.l.b16 %v166
    %v714 = vunpack.c.h.b16 %v166
    %v715 = vunpack.c.l.b16 %v167
    %v716 = vunpack.c.h.b16 %v167
    %v717 = vunpack.c.l.b16 %v168
    %v718 = vunpack.c.h.b16 %v168
    %v719 = vunpack.c.l.b16 %v169
    %v720 = vunpack.c.h.b16 %v169
    %v721 = vunpack.c.l.b16 %v170
    %v722 = vunpack.c.h.b16 %v170
    %v723 = vunpack.c.l.b16 %v171
    %v724 = vunpack.c.h.b16 %v171
    %v725 = vunpack.c.l.b16 %v172
    %v726 = vunpack.c.h.b16 %v172
    %v727 = vunpack.c.l.b16 %v173
    %v728 = vunpack.c.h.b16 %v173
    %v729 = vunpack.c.l.b16 %v174
    %v730 = vunpack.c.h.b16 %v174
    %v731 = vunpack.c.l.b16 %v175
    %v732 = vunpack.c.h.b16 %v175
    %v733 = vunpack.c.l.b16 %v176
    %v734 = vunpack.c.h.b16 %v176
    %v735 = vunpack.c.l.b16 %v177
    %v736 = vunpack.c.h.b16 %v177
    %v737 = vunpack.c.l.b16 %v178
    %v738 = vunpack.c.h.b16 %v178
    %v739 = vunpack.c.l.b16 %v179
    %v740 = vunpack.c.h.b16 %v179
    %v741 = vunpack.c.l.b16 %v180
    %v742 = vunpack.c.h.b16 %v180
    %v743 = vunpack.c.l.b16 %v181
    %v744 = vunpack.c.h.b16 %v181
    %v745 = vunpack.c.l.b16 %v182
    %v746 = vunpack.c.h.b16 %v182
    %v747 = vunpack.c.l.b16 %v183
    %v748 = vunpack.c.h.b16 %v183
    %v749 = vunpack.c.l.b16 %v184
    %v750 = vunpack.c.h.b16 %v184
    %v751 = vunpack.c.l.b16 %v185
    %v752 = vunpack.c.h.b16 %v185
    %v753 = vunpack.c.l.b16 %v186
    %v754 = vunpack.c.h.b16 %v186
    %v755 = vunpack.c.l.b16 %v187
    %v756 = vunpack.c.h.b16 %v187
    %v757 = vunpack.c.l.b16 %v188
    %v758 = vunpack.c.h.b16 %v188
    %v759 = vunpack.c.l.b16 %v189
    %v760 = vunpack.c.h.b16 %v189
    %v761 = vunpack.c.l.b16 %v190
    %v762 = vunpack.c.h.b16 %v190
    %v763 = vunpack.c.l.b16 %v191
    %v764 = vunpack.c.h.b16 %v191
    %v765 = vunpack.c.l.b16 %v192
    %v766 = vunpack.c.h.b16 %v192
    %v767 = vunpack.c.l.b16 %v193
    %v768 = vunpack.c.h.b16 %v193
    %v769 = vunpack.c.l.b16 %v194
    %v770 = vunpack.c.h.b16 %v194
    %v771 = vunpack.c.l.b16 %v195
    %v772 = vunpack.c.h.b16 %v195
    %v773 = vunpack.c.l.b16 %v196
    %v774 = vunpack.c.h.b16 %v196
    %v775 = vunpack.c.l.b16 %v197
    %v776 = vunpack.c.h.b16 %v197
    %v777 = vunpack.c.l.b16 %v198
    %v778 = vunpack.c.h.b16 %v198
    %v779 = vunpack.c.l.b16 %v199
    %v780 = vunpack.c.h.b16 %v199
    %v781 = vunpack.c.l.b16 %v200
    %v782 = vunpack.c.h.b16 %v200
    %v783 = vunpack.c.l.b16 %v201
    %v784 = vunpack.c.h.b16 %v201
    %v785 = vunpack.c.l.b16 %v202
    %v786 = vunpack.c.h.b16 %v202
    %v787 = vunpack.c.l.b16 %v203
    %v788 = vunpack.c.h.b16 %v203
    %v789 = vunpack.c.l.b16 %v204
    %v790 = vunpack.c.h.b16 %v204
    %v791 = vunpack.c.l.b16 %v205
    %v792 = vunpack.c.h.b16 %v205
    %v793 = vunpack.c.l.b16 %v206
    %v794 = vunpack.c.h.b16 %v206
    %v795 = vunpack.c.l.b16 %v207
    %v796 = vunpack.c.h.b16 %v207
    %v797 = vunpack.c.l.b16 %v208
    %v798 = vunpack.c.h.b16 %v208
    %v799 = vunpack.c.l.b16 %v209
    %v800 = vunpack.c.h.b16 %v209
    %v801 = vunpack.c.l.b16 %v210
    %v802 = vunpack.c.h.b16 %v210
    %v803 = vunpack.c.l.b16 %v211
    %v804 = vunpack.c.h.b16 %v211
    %v805 = vunpack.c.l.b16 %v212
    %v806 = vunpack.c.h.b16 %v212
    %v807 = vunpack.c.l.b16 %v213
    %v808 = vunpack.c.h.b16 %v213
    %v809 = vunpack.c.l.b16 %v214
    %v810 = vunpack.c.h.b16 %v214
    %v811 = vunpack.c.l.b16 %v215
    %v812 = vunpack.c.h.b16 %v215
    %v813 = vunpack.c.l.b16 %v216
    %v814 = vunpack.c.h.b16 %v216
    %v815 = vunpack.c.l.b16 %v217
    %v816 = vunpack.c.h.b16 %v217
    %v817 = vunpack.c.l.b16 %v218
    %v818 = vunpack.c.h.b16 %v218
    %v819 = vunpack.c.l.b16 %v219
    %v820 = vunpack.c.h.b16 %v219
    %v821 = vunpack.c.l.b16 %v220
    %v822 = vunpack.c.h.b16 %v220
    %v823 = vunpack.c.l.b16 %v221
    %v824 = vunpack.c.h.b16 %v221
    %v825 = vunpack.c.l.b16 %v222
    %v826 = vunpack.c.h.b16 %v222
    %v827 = vunpack.c.l.b16 %v223
    %v828 = vunpack.c.h.b16 %v223
    %v829 = vunpack.c.l.b16 %v224
    %v830 = vunpack.c.h.b16 %v224
    %v831 = vunpack.c.l.b16 %v225
    %v832 = vunpack.c.h.b16 %v225
    %v833 = vunpack.c.l.b16 %v226
    %v834 = vunpack.c.h.b16 %v226
    %v835 = vunpack.c.l.b16 %v227
    %v836 = vunpack.c.h.b16 %v227
    %v837 = vunpack.c.l.b16 %v228
    %v838 = vunpack.c.h.b16 %v228
    %v839 = vunpack.c.l.b16 %v229
    %v840 = vunpack.c.h.b16 %v229
    %v841 = vunpack.c.l.b16 %v230
    %v842 = vunpack.c.h.b16 %v230
    %v843 = vunpack.c.l.b16 %v231
    %v844 = vunpack.c.h.b16 %v231
    %v845 = vunpack.c.l.b16 %v232
    %v846 = vunpack.c.h.b16 %v232
    %v847 = vunpack.c.l.b16 %v233
    %v848 = vunpack.c.h.b16 %v233
    %v849 = vunpack.c.l.b16 %v234
    %v850 = vunpack.c.h.b16 %v234
    %v851 = vunpack.c.l.b16 %v235
    %v852 = vunpack.c.h.b16 %v235
    %v853 = vunpack.c.l.b16 %v236
    %v854 = vunpack.c.h.b16 %v236
    %v855 = vunpack.c.l.b16 %v237
    %v856 = vunpack.c.h.b16 %v237
    %v857 = vunpack.c.l.b16 %v238
    %v858 = vunpack.c.h.b16 %v238
    %v859 = vunpack.c.l.b16 %v239
    %v860 = vunpack.c.h.b16 %v239
    %v861 = vunpack.c.l.b16 %v240
    %v862 = vunpack.c.h.b16 %v240
    %v863 = vunpack.c.l.b16 %v241
    %v864 = vunpack.c.h.b16 %v241
    %v865 = vunpack.c.l.b16 %v242
    %v866 = vunpack.c.h.b16 %v242
    %v867 = vunpack.c.l.b16 %v243
    %v868 = vunpack.c.h.b16 %v243
    %v869 = vunpack.c.l.b16 %v244
    %v870 = vunpack.c.h.b16 %v244
    %v871 = vunpack.c.l.b16 %v245
    %v872 = vunpack.c.h.b16 %v245
    %v873 = vunpack.c.l.b16 %v246
    %v874 = vunpack.c.h.b16 %v246
    %v875 = vunpack.c.l.b16 %v247
    %v876 = vunpack.c.h.b16 %v247
    %v877 = vunpack.c.l.b16 %v248
    %v878 = vunpack.c.h.b16 %v248
    %v879 = vunpack.c.l.b16 %v249
    %v880 = vunpack.c.h.b16 %v249
    %v881 = vunpack.c.l.b16 %v250
    %v882 = vunpack.c.h.b16 %v250
    %v883 = vunpack.c.l.b16 %v251
    %v884 = vunpack.c.h.b16 %v251
    %v885 = vunpack.c.l.b16 %v252
    %v886 = vunpack.c.h.b16 %v252
    %v887 = vunpack.c.l.b16 %v253
    %v888 = vunpack.c.h.b16 %v253
    %v889 = vunpack.c.l.b16 %v254
    %v890 = vunpack.c.h.b16 %v254
    %v891 = vunpack.c.l.b16 %v255
    %v892 = vunpack.c.h.b16 %v255
    %v893 = vunpack.c.l.b16 %v256
    %v894 = vunpack.c.h.b16 %v256
    %v895 = vunpack.c.l.b16 %v257
    %v896 = vunpack.c.h.b16 %v257
    %v897 = vunpack.c.l.b16 %v258
    %v898 = vunpack.c.h.b16 %v258
    %v899 = vunpack.c.l.b16 %v259
    %v900 = vunpack.c.h.b16 %v259
    %v901 = vunpack.c.l.b16 %v260
    %v902 = vunpack.c.h.b16 %v260
    %v903 = vunpack.c.l.b16 %v261
    %v904 = vunpack.c.h.b16 %v261
    %v905 = vunpack.c.l.b16 %v262
    %v906 = vunpack.c.h.b16 %v262
    %v907 = vunpack.c.l.b16 %v263
    %v908 = vunpack.c.h.b16 %v263
    %v909 = vunpack.c.l.b16 %v264
    %v910 = vunpack.c.h.b16 %v264
    %v911 = vunpack.c.l.b16 %v265
    %v912 = vunpack.c.h.b16 %v265
    %v913 = vunpack.c.l.b16 %v266
    %v914 = vunpack.c.h.b16 %v266
    %v915 = vunpack.c.l.b16 %v267
    %v916 = vunpack.c.h.b16 %v267
    %v917 = vunpack.c.l.b16 %v268
    %v918 = vunpack.c.h.b16 %v268
    %v919 = vunpack.c.l.b16 %v269
    %v920 = vunpack.c.h.b16 %v269
    %v921 = vunpack.c.l.b16 %v270
    %v922 = vunpack.c.h.b16 %v270
    %v923 = vunpack.c.l.b16 %v271
    %v924 = vunpack.c.h.b16 %v271
    %v925 = vunpack.c.l.b16 %v272
    %v926 = vunpack.c.h.b16 %v272
    %v927 = vunpack.c.l.b16 %v273
    %v928 = vunpack.c.h.b16 %v273
    %v929 = vunpack.c.l.b16 %v274
    %v930 = vunpack.c.h.b16 %v274
    %v931 = vunpack.c.l.b16 %v275
    %v932 = vunpack.c.h.b16 %v275
    %v933 = vunpack.c.l.b16 %v276
    %v934 = vunpack.c.h.b16 %v276
    %v935 = vunpack.c.l.b16 %v277
    %v936 = vunpack.c.h.b16 %v277
    %v937 = vunpack.c.l.b16 %v278
    %v938 = vunpack.c.h.b16 %v278
    %v939 = vunpack.c.l.b16 %v279
    %v940 = vunpack.c.h.b16 %v279
    %v941 = vunpack.c.l.b16 %v280
    %v942 = vunpack.c.h.b16 %v280
    %v943 = vunpack.c.l.b16 %v281
    %v944 = vunpack.c.h.b16 %v281
    %v945 = vunpack.c.l.b16 %v282
    %v946 = vunpack.c.h.b16 %v282
    %v947 = vunpack.c.l.b16 %v283
    %v948 = vunpack.c.h.b16 %v283
    %v949 = vunpack.c.l.b16 %v284
    %v950 = vunpack.c.h.b16 %v284
    %v951 = vunpack.c.l.b16 %v285
    %v952 = vunpack.c.h.b16 %v285
    %v953 = vunpack.c.l.b16 %v286
    %v954 = vunpack.c.h.b16 %v286
    %v955 = vunpack.c.l.b16 %v287
    %v956 = vunpack.c.h.b16 %v287
    %v957 = vunpack.c.l.b16 %v288
    %v958 = vunpack.c.h.b16 %v288
    %v959 = vunpack.c.l.b16 %v289
    %v960 = vunpack.c.h.b16 %v289
    %v961 = vunpack.c.l.b16 %v290
    %v962 = vunpack.c.h.b16 %v290
    %v963 = vunpack.c.l.b16 %v291
    %v964 = vunpack.c.h.b16 %v291
    %v965 = vunpack.c.l.b16 %v292
    %v966 = vunpack.c.h.b16 %v292
    %v967 = vunpack.c.l.b16 %v293
    %v968 = vunpack.c.h.b16 %v293
    %v969 = vunpack.c.l.b16 %v294
    %v970 = vunpack.c.h.b16 %v294
    %v971 = vunpack.c.l.b16 %v295
    %v972 = vunpack.c.h.b16 %v295
    %v973 = vunpack.c.l.b16 %v296
    %v974 = vunpack.c.h.b16 %v296
    %v975 = vunpack.c.l.b16 %v297
    %v976 = vunpack.c.h.b16 %v297
    %v977 = vunpack.c.l.b16 %v298
    %v978 = vunpack.c.h.b16 %v298
    %v979 = vunpack.c.l.b16 %v299
    %v980 = vunpack.c.h.b16 %v299
    %v981 = vunpack.c.l.b16 %v300
    %v982 = vunpack.c.h.b16 %v300
    %v983 = vunpack.c.l.b16 %v301
    %v984 = vunpack.c.h.b16 %v301
    %v985 = vunpack.c.l.b16 %v302
    %v986 = vunpack.c.h.b16 %v302
    %v987 = vunpack.c.l.b16 %v303
    %v988 = vunpack.c.h.b16 %v303
    %v989 = vunpack.c.l.b16 %v304
    %v990 = vunpack.c.h.b16 %v304
    %v991 = vunpack.c.l.b16 %v305
    %v992 = vunpack.c.h.b16 %v305
    %v993 = vunpack.c.l.b16 %v306
    %v994 = vunpack.c.h.b16 %v306
    %v995 = vunpack.c.l.b16 %v307
    %v996 = vunpack.c.h.b16 %v307
    %v997 = vunpack.c.l.b16 %v308
    %v998 = vunpack.c.h.b16 %v308
    %v999 = vunpack.c.l.b16 %v309
    %v1000 = vunpack.c.h.b16 %v309
    %v1001 = vunpack.c.l.b16 %v310
    %v1002 = vunpack.c.h.b16 %v310
    %v1003 = vunpack.c.l.b16 %v311
    %v1004 = vunpack.c.h.b16 %v311
    %v1005 = vunpack.c.l.b16 %v312
    %v1006 = vunpack.c.h.b16 %v312
    %v1007 = vunpack.c.l.b16 %v313
    %v1008 = vunpack.c.h.b16 %v313
    %v1009 = vunpack.c.l.b16 %v314
    %v1010 = vunpack.c.h.b16 %v314
    %v1011 = vunpack.c.l.b16 %v315
    %v1012 = vunpack.c.h.b16 %v315
    %v1013 = vunpack.c.l.b16 %v316
    %v1014 = vunpack.c.h.b16 %v316
    %v1015 = vunpack.c.l.b16 %v317
    %v1016 = vunpack.c.h.b16 %v317
    %v1017 = vunpack.c.l.b16 %v318
    %v1018 = vunpack.c.h.b16 %v318
    %v1019 = vunpack.c.l.b16 %v319
    %v1020 = vunpack.c.h.b16 %v319
    %v1021 = vunpack.c.l.b16 %v320
    %v1022 = vunpack.c.h.b16 %v320
    %v1023 = vunpack.c.l.b16 %v321
    %v1024 = vunpack.c.h.b16 %v321
    %v1025 = vunpack.c.l.b16 %v322
    %v1026 = vunpack.c.h.b16 %v322
    %v1027 = vunpack.c.l.b16 %v323
    %v1028 = vunpack.c.h.b16 %v323
    %v1029 = vunpack.c.l.b16 %v324
    %v1030 = vunpack.c.h.b16 %v324
    %v1031 = vunpack.c.l.b16 %v325
    %v1032 = vunpack.c.h.b16 %v325
    %v1033 = vunpack.c.l.b16 %v326
    %v1034 = vunpack.c.h.b16 %v326
    %v1035 = vunpack.c.l.b16 %v327
    %v1036 = vunpack.c.h.b16 %v327
    %v1037 = vunpack.c.l.b16 %v328
    %v1038 = vunpack.c.h.b16 %v328
    %v1039 = vunpack.c.l.b16 %v329
    %v1040 = vunpack.c.h.b16 %v329
    %v1041 = vunpack.c.l.b16 %v330
    %v1042 = vunpack.c.h.b16 %v330
    %v1043 = vunpack.c.l.b16 %v331
    %v1044 = vunpack.c.h.b16 %v331
    %v1045 = vunpack.c.l.b16 %v332
    %v1046 = vunpack.c.h.b16 %v332
    %v1047 = vunpack.c.l.b16 %v333
    %v1048 = vunpack.c.h.b16 %v333
    %v1049 = vunpack.c.l.b16 %v334
    %v1050 = vunpack.c.h.b16 %v334
    %v1051 = vunpack.c.l.b16 %v335
    %v1052 = vunpack.c.h.b16 %v335
    %v1053 = vunpack.c.l.b16 %v336
    %v1054 = vunpack.c.h.b16 %v336
    %v1055 = vunpack.c.l.b16 %v337
    %v1056 = vunpack.c.h.b16 %v337
    %v1057 = vunpack.c.l.b16 %v338
    %v1058 = vunpack.c.h.b16 %v338
    %v1059 = vunpack.c.l.b16 %v339
    %v1060 = vunpack.c.h.b16 %v339
    %v1061 = vunpack.c.l.b16 %v340
    %v1062 = vunpack.c.h.b16 %v340
    %v1063 = vunpack.c.l.b16 %v341
    %v1064 = vunpack.c.h.b16 %v341
    %v1065 = vunpack.c.l.b16 %v342
    %v1066 = vunpack.c.h.b16 %v342
    %v1067 = vunpack.c.l.b16 %v343
    %v1068 = vunpack.c.h.b16 %v343
    %v1069 = vunpack.c.l.b16 %v344
    %v1070 = vunpack.c.h.b16 %v344
    %v1071 = vunpack.c.l.b16 %v345
    %v1072 = vunpack.c.h.b16 %v345
    %v1073 = vunpack.c.l.b16 %v346
    %v1074 = vunpack.c.h.b16 %v346
    %v1075 = vunpack.c.l.b16 %v347
    %v1076 = vunpack.c.h.b16 %v347
    %v1077 = vunpack.c.l.b16 %v348
    %v1078 = vunpack.c.h.b16 %v348
    %v1079 = vpack.c.b16 %v635, %v631
    %v1080 = vpack.c.b16 %v636, %v632
    %v1081 = vpack.c.b16 %v637, %v633
    %v1082 = vpack.c.b16 %v638, %v634
    %v1083 = vpack.c.b16 %v643, %v639
    %v1084 = vpack.c.b16 %v644, %v640
    %v1085 = vpack.c.b16 %v645, %v641
    %v1086 = vpack.c.b16 %v646, %v642
    %v1087 = vpack.c.b16 %v651, %v647
    %v1088 = vpack.c.b16 %v652, %v648
    %v1089 = vpack.c.b16 %v653, %v649
    %v1090 = vpack.c.b16 %v654, %v650
    %v1091 = vpack.c.b16 %v659, %v655
    %v1092 = vpack.c.b16 %v660, %v656
    %v1093 = vpack.c.b16 %v661, %v657
    %v1094 = vpack.c.b16 %v662, %v658
    %v1095 = vpack.c.b16 %v667, %v663
    %v1096 = vpack.c.b16 %v668, %v664
    %v1097 = vpack.c.b16 %v669, %v665
    %v1098 = vpack.c.b16 %v670, %v666
    %v1099 = vpack.c.b16 %v675, %v671
    %v1100 = vpack.c.b16 %v676, %v672
    %v1101 = vpack.c.b16 %v677, %v673
    %v1102 = vpack.c.b16 %v678, %v674
    %v1103 = vpack.c.b16 %v683, %v679
    %v1104 = vpack.c.b16 %v684, %v680
    %v1105 = vpack.c.b16 %v685, %v681
    %v1106 = vpack.c.b16 %v686, %v682
    %v1107 = vpack.c.b16 %v691, %v687
    %v1108 = vpack.c.b16 %v692, %v688
    %v1109 = vpack.c.b16 %v693, %v689
    %v1110 = vpack.c.b16 %v694, %v690
    %v1111 = vpack.c.b16 %v699, %v695
    %v1112 = vpack.c.b16 %v700, %v696
    %v1113 = vpack.c.b16 %v701, %v697
    %v1114 = vpack.c.b16 %v702, %v698
    %v1115 = vpack.c.b16 %v707, %v703
    %v1116 = vpack.c.b16 %v708, %v704
    %v1117 = vpack.c.b16 %v709, %v705
    %v1118 = vpack.c.b16 %v710, %v706
    %v1119 = vpack.c.b16 %v715, %v711
    %v1120 = vpack.c.b16 %v716, %v712
    %v1121 = vpack.c.b16 %v717, %v713
    %v1122 = vpack.c.b16 %v718, %v714
    %v1123 = vpack.c.b16 %v723, %v719
    %v1124 = vpack.c.b16 %v724, %v720
    %v1125 = vpack.c.b16 %v725, %v721
    %v1126 = vpack.c.b16 %v726, %v722
    %v1127 = vpack.c.b16 %v731, %v727
    %v1128 = vpack.c.b16 %v732, %v728
    %v1129 = vpack.c.b16 %v733, %v729
    %v1130 = vpack.c.b16 %v734, %v730
    %v1131 = vpack.c.b16 %v739, %v735
    %v1132 = vpack.c.b16 %v740, %v736
    %v1133 = vpack.c.b16 %v741, %v737
    %v1134 = vpack.c.b16 %v742, %v738
    %v1135 = vpack.c.b16 %v747, %v743
    %v1136 = vpack.c.b16 %v748, %v744
    %v1137 = vpack.c.b16 %v749, %v745
    %v1138 = vpack.c.b16 %v750, %v746
    %v1139 = vpack.c.b16 %v755, %v751
    %v1140 = vpack.c.b16 %v756, %v752
    %v1141 = vpack.c.b16 %v757, %v753
    %v1142 = vpack.c.b16 %v758, %v754
    %v1143 = vpack.c.b16 %v763, %v759
    %v1144 = vpack.c.b16 %v764, %v760
    %v1145 = vpack.c.b16 %v765, %v761
    %v1146 = vpack.c.b16 %v766, %v762
    %v1147 = vpack.c.b16 %v771, %v767
    %v1148 = vpack.c.b16 %v772, %v768
    %v1149 = vpack.c.b16 %v773, %v769
    %v1150 = vpack.c.b16 %v774, %v770
    %v1151 = vpack.c.b16 %v779, %v775
    %v1152 = vpack.c.b16 %v780, %v776
    %v1153 = vpack.c.b16 %v781, %v777
    %v1154 = vpack.c.b16 %v782, %v778
    %v1155 = vpack.c.b16 %v787, %v783
    %v1156 = vpack.c.b16 %v788, %v784
    %v1157 = vpack.c.b16 %v789, %v785
    %v1158 = vpack.c.b16 %v790, %v786
    %v1159 = vpack.c.b16 %v795, %v791
    %v1160 = vpack.c.b16 %v796, %v792
    %v1161 = vpack.c.b16 %v797, %v793
    %v1162 = vpack.c.b16 %v798, %v794
    %v1163 = vpack.c.b16 %v803, %v799
    %v1164 = vpack.c.b16 %v804, %v800
    %v1165 = vpack.c.b16 %v805, %v801
    %v1166 = vpack.c.b16 %v806, %v802
    %v1167 = vpack.c.b16 %v811, %v807
    %v1168 = vpack.c.b16 %v812, %v808
    %v1169 = vpack.c.b16 %v813, %v809
    %v1170 = vpack.c.b16 %v814, %v810
    %v1171 = vpack.c.b16 %v819, %v815
    %v1172 = vpack.c.b16 %v820, %v816
    %v1173 = vpack.c.b16 %v821, %v817
    %v1174 = vpack.c.b16 %v822, %v818
    %v1175 = vpack.c.b16 %v827, %v823
    %v1176 = vpack.c.b16 %v828, %v824
    %v1177 = vpack.c.b16 %v829, %v825
    %v1178 = vpack.c.b16 %v830, %v826
    %v1179 = vpack.c.b16 %v835, %v831
    %v1180 = vpack.c.b16 %v836, %v832
    %v1181 = vpack.c.b16 %v837, %v833
    %v1182 = vpack.c.b16 %v838, %v834
    %v1183 = vpack.c.b16 %v843, %v839
    %v1184 = vpack.c.b16 %v844, %v840
    %v1185 = vpack.c.b16 %v845, %v841
    %v1186 = vpack.c.b16 %v846, %v842
    %v1187 = vpack.c.b16 %v851, %v847
    %v1188 = vpack.c.b16 %v852, %v848
    %v1189 = vpack.c.b16 %v853, %v849
    %v1190 = vpack.c.b16 %v854, %v850
    %v1191 = vpack.c.b16 %v859, %v855
    %v1192 = vpack.c.b16 %v860, %v856
    %v1193 = vpack.c.b16 %v861, %v857
    %v1194 = vpack.c.b16 %v862, %v858
    %v1195 = vpack.c.b16 %v867, %v863
    %v1196 = vpack.c.b16 %v868, %v864
    %v1197 = vpack.c.b16 %v869, %v865
    %v1198 = vpack.c.b16 %v870, %v866
    %v1199 = vpack.c.b16 %v875, %v871
    %v1200 = vpack.c.b16 %v876, %v872
    %v1201 = vpack.c.b16 %v877, %v873
    %v1202 = vpack.c.b16 %v878, %v874
    %v1203 = vpack.c.b16 %v883, %v879
    %v1204 = vpack.c.b16 %v884, %v880
    %v1205 = vpack.c.b16 %v885, %v881
    %v1206 = vpack.c.b16 %v886, %v882
    %v1207 = vpack.c.b16 %v891, %v887
    %v1208 = vpack.c.b16 %v892, %v888
    %v1209 = vpack.c.b16 %v893, %v889
    %v1210 = vpack.c.b16 %v894, %v890
    %v1211 = vpack.c.b16 %v899, %v895
    %v1212 = vpack.c.b16 %v900, %v896
    %v1213 = vpack.c.b16 %v901, %v897
    %v1214 = vpack.c.b16 %v902, %v898
    %v1215 = vpack.c.b16 %v907, %v903
    %v1216 = vpack.c.b16 %v908, %v904
    %v1217 = vpack.c.b16 %v909, %v905
    %v1218 = vpack.c.b16 %v910, %v906
    %v1219 = vpack.c.b16 %v915, %v911
    %v1220 = vpack.c.b16 %v916, %v912
    %v1221 = vpack.c.b16 %v917, %v913
    %v1222 = vpack.c.b16 %v918, %v914
    %v1223 = vpack.c.b16 %v923, %v919
    %v1224 = vpack.c.b16 %v924, %v920
    %v1225 = vpack.c.b16 %v925, %v921
    %v1226 = vpack.c.b16 %v926, %v922
    %v1227 = vpack.c.b16 %v931, %v927
    %v1228 = vpack.c.b16 %v932, %v928
    %v1229 = vpack.c.b16 %v933, %v929
    %v1230 = vpack.c.b16 %v934, %v930
    %v1231 = vpack.c.b16 %v939, %v935
    %v1232 = vpack.c.b16 %v940, %v936
    %v1233 = vpack.c.b16 %v941, %v937
    %v1234 = vpack.c.b16 %v942, %v938
    %v1235 = vpack.c.b16 %v947, %v943
    %v1236 = vpack.c.b16 %v948, %v944
    %v1237 = vpack.c.b16 %v949, %v945
    %v1238 = vpack.c.b16 %v950, %v946
    %v1239 = vpack.c.b16 %v955, %v951
    %v1240 = vpack.c.b16 %v956, %v952
    %v1241 = vpack.c.b16 %v957, %v953
    %v1242 = vpack.c.b16 %v958, %v954
    %v1243 = vpack.c.b16 %v963, %v959
    %v1244 = vpack.c.b16 %v964, %v960
    %v1245 = vpack.c.b16 %v965, %v961
    %v1246 = vpack.c.b16 %v966, %v962
    %v1247 = vpack.c.b16 %v971, %v967
    %v1248 = vpack.c.b16 %v972, %v968
    %v1249 = vpack.c.b16 %v973, %v969
    %v1250 = vpack.c.b16 %v974, %v970
    %v1251 = vpack.c.b16 %v979, %v975
    %v1252 = vpack.c.b16 %v980, %v976
    %v1253 = vpack.c.b16 %v981, %v977
    %v1254 = vpack.c.b16 %v982, %v978
    %v1255 = vpack.c.b16 %v987, %v983
    %v1256 = vpack.c.b16 %v988, %v984
    %v1257 = vpack.c.b16 %v989, %v985
    %v1258 = vpack.c.b16 %v990, %v986
    %v1259 = vpack.c.b16 %v995, %v991
    %v1260 = vpack.c.b16 %v996, %v992
    %v1261 = vpack.c.b16 %v997, %v993
    %v1262 = vpack.c.b16 %v998, %v994
    %v1263 = vpack.c.b16 %v1003, %v999
    %v1264 = vpack.c.b16 %v1004, %v1000
    %v1265 = vpack.c.b16 %v1005, %v1001
    %v1266 = vpack.c.b16 %v1006, %v1002
    %v1267 = vpack.c.b16 %v1011, %v1007
    %v1268 = vpack.c.b16 %v1012, %v1008
    %v1269 = vpack.c.b16 %v1013, %v1009
    %v1270 = vpack.c.b16 %v1014, %v1010
    %v1271 = vpack.c.b16 %v1019, %v1015
    %v1272 = vpack.c.b16 %v1020, %v1016
    %v1273 = vpack.c.b16 %v1021, %v1017
    %v1274 = vpack.c.b16 %v1022, %v1018
    %v1275 = vpack.c.b16 %v1027, %v1023
    %v1276 = vpack.c.b16 %v1028, %v1024
    %v1277 = vpack.c.b16 %v1029, %v1025
    %v1278 = vpack.c.b16 %v1030, %v1026
    %v1279 = vpack.c.b16 %v1035, %v1031
    %v1280 = vpack.c.b16 %v1036, %v1032
    %v1281 = vpack.c.b16 %v1037, %v1033
    %v1282 = vpack.c.b16 %v1038, %v1034
    %v1283 = vpack.c.b16 %v1043, %v1039
    %v1284 = vpack.c.b16 %v1044, %v1040
    %v1285 = vpack.c.b16 %v1045, %v1041
    %v1286 = vpack.c.b16 %v1046, %v1042
    %v1287 = vpack.c.b16 %v1051, %v1047
    %v1288 = vpack.c.b16 %v1052, %v1048
    %v1289 = vpack.c.b16 %v1053, %v1049
    %v1290 = vpack.c.b16 %v1054, %v1050
    %v1291 = vpack.c.b16 %v1059, %v1055
    %v1292 = vpack.c.b16 %v1060, %v1056
    %v1293 = vpack.c.b16 %v1061, %v1057
    %v1294 = vpack.c.b16 %v1062, %v1058
    %v1295 = vpack.c.b16 %v1067, %v1063
    %v1296 = vpack.c.b16 %v1068, %v1064
    %v1297 = vpack.c.b16 %v1069, %v1065
    %v1298 = vpack.c.b16 %v1070, %v1066
    %v1299 = vpack.c.b16 %v1075, %v1071
    %v1300 = vpack.c.b16 %v1076, %v1072
    %v1301 = vpack.c.b16 %v1077, %v1073
    %v1302 = vpack.c.b16 %v1078, %v1074
    %1527 = vmatprep.subr.bf16.mxu0 %v1080
    %1528 = vmatpush1.bf16.msra.mxu0 %v1079
    %1529 = vmatprep.subr.bf16.mxu0 %v1084
    %1530 = vmatpush1.bf16.msra.mxu0 %v1083
    %1531 = vmatprep.subr.bf16.mxu0 %v1088
    %1532 = vmatpush1.bf16.msra.mxu0 %v1087
    %1533 = vmatprep.subr.bf16.mxu0 %v1092
    %1534 = vmatpush1.bf16.msra.mxu0 %v1091
    %1535 = vmatprep.subr.bf16.mxu0 %v1096
    %1536 = vmatpush1.bf16.msra.mxu0 %v1095
    %1537 = vmatprep.subr.bf16.mxu0 %v1100
    %1538 = vmatpush1.bf16.msra.mxu0 %v1099
    %1539 = vmatprep.subr.bf16.mxu0 %v1104
    %1540 = vmatpush1.bf16.msra.mxu0 %v1103
    %1541 = vmatprep.subr.bf16.mxu0 %v1108
    %1542 = vmatpush1.bf16.msra.mxu0 %v1107
    %1543 = vmatprep.subr.bf16.mxu0 %v1112
    %1544 = vmatpush1.bf16.msra.mxu0 %v1111
    %1545 = vmatprep.subr.bf16.mxu0 %v1116
    %1546 = vmatpush1.bf16.msra.mxu0 %v1115
    %1547 = vmatprep.subr.bf16.mxu0 %v1120
    %1548 = vmatpush1.bf16.msra.mxu0 %v1119
    %1549 = vmatprep.subr.bf16.mxu0 %v1124
    %1550 = vmatpush1.bf16.msra.mxu0 %v1123
    %1551 = vmatprep.subr.bf16.mxu0 %v1128
    %1552 = vmatpush1.bf16.msra.mxu0 %v1127
    %1553 = vmatprep.subr.bf16.mxu0 %v1132
    %1554 = vmatpush1.bf16.msra.mxu0 %v1131
    %1555 = vmatprep.subr.bf16.mxu0 %v1136
    %1556 = vmatpush1.bf16.msra.mxu0 %v1135
    %1557 = vmatprep.subr.bf16.mxu0 %v1140
    %1558 = vmatpush1.bf16.msra.mxu0 %v1139
    %1559 = vmatprep.mubr.bf16.mxu0 %v394
    %1560 = vmatmul.mubr.bf16.gmra.mrb[0].mxu0 %v393
    %v1561 = vpop.f32.mrb[0].mxu0
    %v1562 = vadd.f32 %v354, %v1561
    %v1563 = vpop.f32.mrb[0].mxu0
    %v1564 = vadd.f32 %v358, %v1563
    %v1565 = vpop.f32.mrb[0].mxu0
    %v1566 = vadd.f32 %v354, %v1565
    %v1567 = vpop.f32.mrb[0].mxu0
    %v1568 = vadd.f32 %v358, %v1567
    %1569 = vdwg.mxu0
    %1570 = vmatprep.subr.bf16.mxu0 %v1144
    %1571 = vmatpush1.bf16.msra.mxu0 %v1143
    %1572 = vmatprep.subr.bf16.mxu0 %v1148
    %1573 = vmatpush1.bf16.msra.mxu0 %v1147
    %1574 = vmatprep.subr.bf16.mxu0 %v1152
    %1575 = vmatpush1.bf16.msra.mxu0 %v1151
    %1576 = vmatprep.subr.bf16.mxu0 %v1156
    %1577 = vmatpush1.bf16.msra.mxu0 %v1155
    %1578 = vmatprep.subr.bf16.mxu0 %v1160
    %1579 = vmatpush1.bf16.msra.mxu0 %v1159
    %1580 = vmatprep.subr.bf16.mxu0 %v1164
    %1581 = vmatpush1.bf16.msra.mxu0 %v1163
    %1582 = vmatprep.subr.bf16.mxu0 %v1168
    %1583 = vmatpush1.bf16.msra.mxu0 %v1167
    %1584 = vmatprep.subr.bf16.mxu0 %v1172
    %1585 = vmatpush1.bf16.msra.mxu0 %v1171
    %1586 = vmatprep.subr.bf16.mxu0 %v1176
    %1587 = vmatpush1.bf16.msra.mxu0 %v1175
    %1588 = vmatprep.subr.bf16.mxu0 %v1180
    %1589 = vmatpush1.bf16.msra.mxu0 %v1179
    %1590 = vmatprep.subr.bf16.mxu0 %v1184
    %1591 = vmatpush1.bf16.msra.mxu0 %v1183
    %1592 = vmatprep.subr.bf16.mxu0 %v1188
    %1593 = vmatpush1.bf16.msra.mxu0 %v1187
    %1594 = vmatprep.subr.bf16.mxu0 %v1192
    %1595 = vmatpush1.bf16.msra.mxu0 %v1191
    %1596 = vmatprep.subr.bf16.mxu0 %v1196
    %1597 = vmatpush1.bf16.msra.mxu0 %v1195
    %1598 = vmatprep.subr.bf16.mxu0 %v1200
    %1599 = vmatpush1.bf16.msra.mxu0 %v1199
    %1600 = vmatprep.subr.bf16.mxu0 %v1204
    %1601 = vmatpush1.bf16.msra.mxu0 %v1203
    %1602 = vmatprep.mubr.bf16.mxu0 %v396
    %1603 = vmatmul.mubr.bf16.gmra.mrb[0].mxu0 %v395
    %v1604 = vpop.f32.mrb[0].mxu0
    %v1605 = vadd.f32 %v1562, %v1604
    %v1606 = vpop.f32.mrb[0].mxu0
    %v1607 = vadd.f32 %v1564, %v1606
    %v1608 = vpop.f32.mrb[0].mxu0
    %v1609 = vadd.f32 %v1566, %v1608
    %v1610 = vpop.f32.mrb[0].mxu0
    %v1611 = vadd.f32 %v1568, %v1610
    %1612 = vdwg.mxu0
    %1613 = vmatprep.subr.bf16.mxu0 %v1208
    %1614 = vmatpush1.bf16.msra.mxu0 %v1207
    %1615 = vmatprep.subr.bf16.mxu0 %v1212
    %1616 = vmatpush1.bf16.msra.mxu0 %v1211
    %1617 = vmatprep.subr.bf16.mxu0 %v1216
    %1618 = vmatpush1.bf16.msra.mxu0 %v1215
    %1619 = vmatprep.subr.bf16.mxu0 %v1220
    %1620 = vmatpush1.bf16.msra.mxu0 %v1219
    %1621 = vmatprep.subr.bf16.mxu0 %v1224
    %1622 = vmatpush1.bf16.msra.mxu0 %v1223
    %1623 = vmatprep.subr.bf16.mxu0 %v1228
    %1624 = vmatpush1.bf16.msra.mxu0 %v1227
    %1625 = vmatprep.subr.bf16.mxu0 %v1232
    %1626 = vmatpush1.bf16.msra.mxu0 %v1231
    %1627 = vmatprep.subr.bf16.mxu0 %v1236
    %1628 = vmatpush1.bf16.msra.mxu0 %v1235
    %1629 = vmatprep.subr.bf16.mxu0 %v1240
    %1630 = vmatpush1.bf16.msra.mxu0 %v1239
    %1631 = vmatprep.subr.bf16.mxu0 %v1244
    %1632 = vmatpush1.bf16.msra.mxu0 %v1243
    %1633 = vmatprep.subr.bf16.mxu0 %v1248
    %1634 = vmatpush1.bf16.msra.mxu0 %v1247
    %1635 = vmatprep.subr.bf16.mxu0 %v1252
    %1636 = vmatpush1.bf16.msra.mxu0 %v1251
    %1637 = vmatprep.subr.bf16.mxu0 %v1256
    %1638 = vmatpush1.bf16.msra.mxu0 %v1255
    %1639 = vmatprep.subr.bf16.mxu0 %v1260
    %1640 = vmatpush1.bf16.msra.mxu0 %v1259
    %1641 = vmatprep.subr.bf16.mxu0 %v1264
    %1642 = vmatpush1.bf16.msra.mxu0 %v1263
    %1643 = vmatprep.subr.bf16.mxu0 %v1268
    %1644 = vmatpush1.bf16.msra.mxu0 %v1267
    %1645 = vmatprep.mubr.bf16.mxu0 %v398
    %1646 = vmatmul.mubr.bf16.gmra.mrb[0].mxu0 %v397
    %v1647 = vpop.f32.mrb[0].mxu0
    %v1648 = vadd.f32 %v1605, %v1647
    %v1649 = vpop.f32.mrb[0].mxu0
    %v1650 = vadd.f32 %v1607, %v1649
    %v1651 = vpop.f32.mrb[0].mxu0
    %v1652 = vadd.f32 %v1609, %v1651
    %v1653 = vpop.f32.mrb[0].mxu0
    %v1654 = vadd.f32 %v1611, %v1653
    %1655 = vdwg.mxu0
    %1656 = vmatprep.subr.bf16.mxu0 %v1272
    %1657 = vmatpush1.bf16.msra.mxu0 %v1271
    %1658 = vmatprep.subr.bf16.mxu0 %v1276
    %1659 = vmatpush1.bf16.msra.mxu0 %v1275
    %1660 = vmatprep.subr.bf16.mxu0 %v1280
    %1661 = vmatpush1.bf16.msra.mxu0 %v1279
    %1662 = vmatprep.subr.bf16.mxu0 %v1284
    %1663 = vmatpush1.bf16.msra.mxu0 %v1283
    %1664 = vmatprep.subr.bf16.mxu0 %v1288
    %1665 = vmatpush1.bf16.msra.mxu0 %v1287
    %1666 = vmatprep.subr.bf16.mxu0 %v1292
    %1667 = vmatpush1.bf16.msra.mxu0 %v1291
    %1668 = vmatprep.subr.bf16.mxu0 %v1296
    %1669 = vmatpush1.bf16.msra.mxu0 %v1295
    %1670 = vmatprep.subr.bf16.mxu0 %v1300
    %1671 = vmatpush1.bf16.msra.mxu0 %v1299
    %1672 = vmatprep.subr.bf16.mxu0 0
    %1673 = vmatpush1.bf16.msra.mxu0 0
    %1674 = vmatprep.subr.bf16.mxu0 0
    %1675 = vmatpush1.bf16.msra.mxu0 0
    %1676 = vmatprep.subr.bf16.mxu0 0
    %1677 = vmatpush1.bf16.msra.mxu0 0
    %1678 = vmatprep.subr.bf16.mxu0 0
    %1679 = vmatpush1.bf16.msra.mxu0 0
    %1680 = vmatprep.subr.bf16.mxu0 0
    %1681 = vmatpush1.bf16.msra.mxu0 0
    %1682 = vmatprep.subr.bf16.mxu0 0
    %1683 = vmatpush1.bf16.msra.mxu0 0
    %1684 = vmatprep.subr.bf16.mxu0 0
    %1685 = vmatpush1.bf16.msra.mxu0 0
    %1686 = vmatprep.subr.bf16.mxu0 0
    %1687 = vmatpush1.bf16.msra.mxu0 0
    %1688 = vmatprep.mubr.bf16.mxu0 0
    %1689 = vmatmul.mubr.bf16.gmra.mrb[0].mxu0 %v399
    %v1690 = vpop.f32.mrb[0].mxu0
    %v1691 = vadd.f32 %v1648, %v1690
    %v1692 = vpop.f32.mrb[0].mxu0
    %v1693 = vadd.f32 %v1650, %v1692
    %v1694 = vpop.f32.mrb[0].mxu0
    %v1695 = vadd.f32 %v1652, %v1694
    %v1696 = vpop.f32.mrb[0].mxu0
    %v1697 = vadd.f32 %v1654, %v1696
    %1698 = vdwg.mxu0
    %1699 = vmatprep.subr.bf16.mxu0 %v1082
    %1700 = vmatpush1.bf16.msra.mxu0 %v1081
    %1701 = vmatprep.subr.bf16.mxu0 %v1086
    %1702 = vmatpush1.bf16.msra.mxu0 %v1085
    %1703 = vmatprep.subr.bf16.mxu0 %v1090
    %1704 = vmatpush1.bf16.msra.mxu0 %v1089
    %1705 = vmatprep.subr.bf16.mxu0 %v1094
    %1706 = vmatpush1.bf16.msra.mxu0 %v1093
    %1707 = vmatprep.subr.bf16.mxu0 %v1098
    %1708 = vmatpush1.bf16.msra.mxu0 %v1097
    %1709 = vmatprep.subr.bf16.mxu0 %v1102
    %1710 = vmatpush1.bf16.msra.mxu0 %v1101
    %1711 = vmatprep.subr.bf16.mxu0 %v1106
    %1712 = vmatpush1.bf16.msra.mxu0 %v1105
    %1713 = vmatprep.subr.bf16.mxu0 %v1110
    %1714 = vmatpush1.bf16.msra.mxu0 %v1109
    %1715 = vmatprep.subr.bf16.mxu0 %v1114
    %1716 = vmatpush1.bf16.msra.mxu0 %v1113
    %1717 = vmatprep.subr.bf16.mxu0 %v1118
    %1718 = vmatpush1.bf16.msra.mxu0 %v1117
    %1719 = vmatprep.subr.bf16.mxu0 %v1122
    %1720 = vmatpush1.bf16.msra.mxu0 %v1121
    %1721 = vmatprep.subr.bf16.mxu0 %v1126
    %1722 = vmatpush1.bf16.msra.mxu0 %v1125
    %1723 = vmatprep.subr.bf16.mxu0 %v1130
    %1724 = vmatpush1.bf16.msra.mxu0 %v1129
    %1725 = vmatprep.subr.bf16.mxu0 %v1134
    %1726 = vmatpush1.bf16.msra.mxu0 %v1133
    %1727 = vmatprep.subr.bf16.mxu0 %v1138
    %1728 = vmatpush1.bf16.msra.mxu0 %v1137
    %1729 = vmatprep.subr.bf16.mxu0 %v1142
    %1730 = vmatpush1.bf16.msra.mxu0 %v1141
    %1731 = vmatprep.mubr.bf16.mxu0 %v394
    %1732 = vmatmul.mubr.bf16.gmra.mrb[0].mxu0 %v393
    %v1733 = vpop.f32.mrb[0].mxu0
    %v1734 = vadd.f32 %v362, %v1733
    %v1735 = vpop.f32.mrb[0].mxu0
    %v1736 = vadd.f32 %v366, %v1735
    %v1737 = vpop.f32.mrb[0].mxu0
    %v1738 = vadd.f32 %v362, %v1737
    %v1739 = vpop.f32.mrb[0].mxu0
    %v1740 = vadd.f32 %v366, %v1739
    %1741 = vdwg.mxu0
    %1742 = vmatprep.subr.bf16.mxu0 %v1146
    %1743 = vmatpush1.bf16.msra.mxu0 %v1145
    %1744 = vmatprep.subr.bf16.mxu0 %v1150
    %1745 = vmatpush1.bf16.msra.mxu0 %v1149
    %1746 = vmatprep.subr.bf16.mxu0 %v1154
    %1747 = vmatpush1.bf16.msra.mxu0 %v1153
    %1748 = vmatprep.subr.bf16.mxu0 %v1158
    %1749 = vmatpush1.bf16.msra.mxu0 %v1157
    %1750 = vmatprep.subr.bf16.mxu0 %v1162
    %1751 = vmatpush1.bf16.msra.mxu0 %v1161
    %1752 = vmatprep.subr.bf16.mxu0 %v1166
    %1753 = vmatpush1.bf16.msra.mxu0 %v1165
    %1754 = vmatprep.subr.bf16.mxu0 %v1170
    %1755 = vmatpush1.bf16.msra.mxu0 %v1169
    %1756 = vmatprep.subr.bf16.mxu0 %v1174
    %1757 = vmatpush1.bf16.msra.mxu0 %v1173
    %1758 = vmatprep.subr.bf16.mxu0 %v1178
    %1759 = vmatpush1.bf16.msra.mxu0 %v1177
    %1760 = vmatprep.subr.bf16.mxu0 %v1182
    %1761 = vmatpush1.bf16.msra.mxu0 %v1181
    %1762 = vmatprep.subr.bf16.mxu0 %v1186
    %1763 = vmatpush1.bf16.msra.mxu0 %v1185
    %1764 = vmatprep.subr.bf16.mxu0 %v1190
    %1765 = vmatpush1.bf16.msra.mxu0 %v1189
    %1766 = vmatprep.subr.bf16.mxu0 %v1194
    %1767 = vmatpush1.bf16.msra.mxu0 %v1193
    %1768 = vmatprep.subr.bf16.mxu0 %v1198
    %1769 = vmatpush1.bf16.msra.mxu0 %v1197
    %1770 = vmatprep.subr.bf16.mxu0 %v1202
    %1771 = vmatpush1.bf16.msra.mxu0 %v1201
    %1772 = vmatprep.subr.bf16.mxu0 %v1206
    %1773 = vmatpush1.bf16.msra.mxu0 %v1205
    %1774 = vmatprep.mubr.bf16.mxu0 %v396
    %1775 = vmatmul.mubr.bf16.gmra.mrb[0].mxu0 %v395
    %v1776 = vpop.f32.mrb[0].mxu0
    %v1777 = vadd.f32 %v1734, %v1776
    %v1778 = vpop.f32.mrb[0].mxu0
    %v1779 = vadd.f32 %v1736, %v1778
    %v1780 = vpop.f32.mrb[0].mxu0
    %v1781 = vadd.f32 %v1738, %v1780
    %v1782 = vpop.f32.mrb[0].mxu0
    %v1783 = vadd.f32 %v1740, %v1782
    %1784 = vdwg.mxu0
    %1785 = vmatprep.subr.bf16.mxu0 %v1210
    %1786 = vmatpush1.bf16.msra.mxu0 %v1209
    %1787 = vmatprep.subr.bf16.mxu0 %v1214
    %1788 = vmatpush1.bf16.msra.mxu0 %v1213
    %1789 = vmatprep.subr.bf16.mxu0 %v1218
    %1790 = vmatpush1.bf16.msra.mxu0 %v1217
    %1791 = vmatprep.subr.bf16.mxu0 %v1222
    %1792 = vmatpush1.bf16.msra.mxu0 %v1221
    %1793 = vmatprep.subr.bf16.mxu0 %v1226
    %1794 = vmatpush1.bf16.msra.mxu0 %v1225
    %1795 = vmatprep.subr.bf16.mxu0 %v1230
    %1796 = vmatpush1.bf16.msra.mxu0 %v1229
    %1797 = vmatprep.subr.bf16.mxu0 %v1234
    %1798 = vmatpush1.bf16.msra.mxu0 %v1233
    %1799 = vmatprep.subr.bf16.mxu0 %v1238
    %1800 = vmatpush1.bf16.msra.mxu0 %v1237
    %1801 = vmatprep.subr.bf16.mxu0 %v1242
    %1802 = vmatpush1.bf16.msra.mxu0 %v1241
    %1803 = vmatprep.subr.bf16.mxu0 %v1246
    %1804 = vmatpush1.bf16.msra.mxu0 %v1245
    %1805 = vmatprep.subr.bf16.mxu0 %v1250
    %1806 = vmatpush1.bf16.msra.mxu0 %v1249
    %1807 = vmatprep.subr.bf16.mxu0 %v1254
    %1808 = vmatpush1.bf16.msra.mxu0 %v1253
    %1809 = vmatprep.subr.bf16.mxu0 %v1258
    %1810 = vmatpush1.bf16.msra.mxu0 %v1257
    %1811 = vmatprep.subr.bf16.mxu0 %v1262
    %1812 = vmatpush1.bf16.msra.mxu0 %v1261
    %1813 = vmatprep.subr.bf16.mxu0 %v1266
    %1814 = vmatpush1.bf16.msra.mxu0 %v1265
    %1815 = vmatprep.subr.bf16.mxu0 %v1270
    %1816 = vmatpush1.bf16.msra.mxu0 %v1269
    %1817 = vmatprep.mubr.bf16.mxu0 %v398
    %1818 = vmatmul.mubr.bf16.gmra.mrb[0].mxu0 %v397
    %v1819 = vpop.f32.mrb[0].mxu0
    %v1820 = vadd.f32 %v1777, %v1819
    %v1821 = vpop.f32.mrb[0].mxu0
    %v1822 = vadd.f32 %v1779, %v1821
    %v1823 = vpop.f32.mrb[0].mxu0
    %v1824 = vadd.f32 %v1781, %v1823
    %v1825 = vpop.f32.mrb[0].mxu0
    %v1826 = vadd.f32 %v1783, %v1825
    %1827 = vdwg.mxu0
    %1828 = vmatprep.subr.bf16.mxu0 %v1274
    %1829 = vmatpush1.bf16.msra.mxu0 %v1273
    %1830 = vmatprep.subr.bf16.mxu0 %v1278
    %1831 = vmatpush1.bf16.msra.mxu0 %v1277
    %1832 = vmatprep.subr.bf16.mxu0 %v1282
    %1833 = vmatpush1.bf16.msra.mxu0 %v1281
    %1834 = vmatprep.subr.bf16.mxu0 %v1286
    %1835 = vmatpush1.bf16.msra.mxu0 %v1285
    %1836 = vmatprep.subr.bf16.mxu0 %v1290
    %1837 = vmatpush1.bf16.msra.mxu0 %v1289
    %1838 = vmatprep.subr.bf16.mxu0 %v1294
    %1839 = vmatpush1.bf16.msra.mxu0 %v1293
    %1840 = vmatprep.subr.bf16.mxu0 %v1298
    %1841 = vmatpush1.bf16.msra.mxu0 %v1297
    %1842 = vmatprep.subr.bf16.mxu0 %v1302
    %1843 = vmatpush1.bf16.msra.mxu0 %v1301
    %1844 = vmatprep.subr.bf16.mxu0 0
    %1845 = vmatpush1.bf16.msra.mxu0 0
    %1846 = vmatprep.subr.bf16.mxu0 0
    %1847 = vmatpush1.bf16.msra.mxu0 0
    %1848 = vmatprep.subr.bf16.mxu0 0
    %1849 = vmatpush1.bf16.msra.mxu0 0
    %1850 = vmatprep.subr.bf16.mxu0 0
    %1851 = vmatpush1.bf16.msra.mxu0 0
    %1852 = vmatprep.subr.bf16.mxu0 0
    %1853 = vmatpush1.bf16.msra.mxu0 0
    %1854 = vmatprep.subr.bf16.mxu0 0
    %1855 = vmatpush1.bf16.msra.mxu0 0
    %1856 = vmatprep.subr.bf16.mxu0 0
    %1857 = vmatpush1.bf16.msra.mxu0 0
    %1858 = vmatprep.subr.bf16.mxu0 0
    %1859 = vmatpush1.bf16.msra.mxu0 0
    %1860 = vmatprep.mubr.bf16.mxu0 0
    %1861 = vmatmul.mubr.bf16.gmra.mrb[0].mxu0 %v399
    %v1862 = vpop.f32.mrb[0].mxu0
    %v1863 = vadd.f32 %v1820, %v1862
    %v1864 = vpop.f32.mrb[0].mxu0
    %v1865 = vadd.f32 %v1822, %v1864
    %v1866 = vpop.f32.mrb[0].mxu0
    %v1867 = vadd.f32 %v1824, %v1866
    %v1868 = vpop.f32.mrb[0].mxu0
    %v1869 = vadd.f32 %v1826, %v1868
    %1870 = vdwg.mxu0
    %v1871 = vmax.f32 %v1691, 0.0
    %v1872 = vmax.f32 %v1693, 0.0
    %v1873 = vmax.f32 %v1863, 0.0
    %v1874 = vmax.f32 %v1865, 0.0
    %v1875 = vmax.f32 %v1695, 0.0
    %v1876 = vmax.f32 %v1697, 0.0
    %v1877 = vmax.f32 %v1867, 0.0
    %v1878 = vmax.f32 %v1869, 0.0
    %v1879 = vpack.c.bf16 %v1875, %v1871
    %v1880 = vpack.c.bf16 %v1876, %v1872
    %v1881 = vpack.c.bf16 %v1877, %v1873
    %v1882 = vpack.c.bf16 %v1878, %v1874
    %v1883 = vld [vmem:[#allocation8] sm:$0xff]
    %v1884 = vld [vmem:[#allocation8 + $0x8] sm:$0xff]
    %v1885 = vld [vmem:[#allocation8 + $0x10] sm:$0xff]
    %v1886 = vld [vmem:[#allocation8 + $0x18] sm:$0xff]
    %v1887 = vld [vmem:[#allocation8 + $0x20] sm:$0xff]
    %v1888 = vld [vmem:[#allocation8 + $0x28] sm:$0xff]
    %v1889 = vld [vmem:[#allocation8 + $0x30] sm:$0xff]
    %v1890 = vld [vmem:[#allocation8 + $0x38] sm:$0xff]
    %v1891 = vld [vmem:[#allocation8 + $0x40] sm:$0xff]
    %v1892 = vld [vmem:[#allocation8 + $0x48] sm:$0xff]
    %v1893 = vld [vmem:[#allocation8 + $0x50] sm:$0xff]
    %v1894 = vld [vmem:[#allocation8 + $0x58] sm:$0xff]
    %v1895 = vld [vmem:[#allocation8 + $0x60] sm:$0xff]
    %v1896 = vld [vmem:[#allocation8 + $0x68] sm:$0xff]
    %v1897 = vld [vmem:[#allocation8 + $0x70] sm:$0xff]
    %v1898 = vld [vmem:[#allocation8 + $0x78] sm:$0xff]
    %v1899 = vld [vmem:[#allocation8 + $0x80] sm:$0xff]
    %v1900 = vld [vmem:[#allocation8 + $0x88] sm:$0xff]
    %v1901 = vld [vmem:[#allocation8 + $0x90] sm:$0xff]
    %v1902 = vld [vmem:[#allocation8 + $0x98] sm:$0xff]
    %v1903 = vld [vmem:[#allocation8 + $0xa0] sm:$0xff]
    %v1904 = vld [vmem:[#allocation8 + $0xa8] sm:$0xff]
    %v1905 = vld [vmem:[#allocation8 + $0xb0] sm:$0xff]
    %v1906 = vld [vmem:[#allocation8 + $0xb8] sm:$0xff]
    %v1907 = vld [vmem:[#allocation8 + $0xc0] sm:$0xff]
    %v1908 = vld [vmem:[#allocation8 + $0xc8] sm:$0xff]
    %v1909 = vld [vmem:[#allocation8 + $0xd0] sm:$0xff]
    %v1910 = vld [vmem:[#allocation8 + $0xd8] sm:$0xff]
    %v1911 = vld [vmem:[#allocation8 + $0xe0] sm:$0xff]
    %v1912 = vld [vmem:[#allocation8 + $0xe8] sm:$0xff]
    %v1913 = vld [vmem:[#allocation8 + $0xf0] sm:$0xff]
    %v1914 = vld [vmem:[#allocation8 + $0xf8] sm:$0xff]
    %v1915 = vld [vmem:[#allocation8 + $0x100] sm:$0xff]
    %v1916 = vld [vmem:[#allocation8 + $0x108] sm:$0xff]
    %v1917 = vld [vmem:[#allocation8 + $0x110] sm:$0xff]
    %v1918 = vld [vmem:[#allocation8 + $0x118] sm:$0xff]
    %v1919 = vld [vmem:[#allocation8 + $0x120] sm:$0xff]
    %v1920 = vld [vmem:[#allocation8 + $0x128] sm:$0xff]
    %v1921 = vld [vmem:[#allocation8 + $0x130] sm:$0xff]
    %v1922 = vld [vmem:[#allocation8 + $0x138] sm:$0xff]
    %v1923 = vld [vmem:[#allocation8 + $0x140] sm:$0xff]
    %v1924 = vld [vmem:[#allocation8 + $0x148] sm:$0xff]
    %v1925 = vld [vmem:[#allocation8 + $0x150] sm:$0xff]
    %v1926 = vld [vmem:[#allocation8 + $0x158] sm:$0xff]
    %v1927 = vld [vmem:[#allocation8 + $0x160] sm:$0xff]
    %v1928 = vld [vmem:[#allocation8 + $0x168] sm:$0xff]
    %v1929 = vld [vmem:[#allocation8 + $0x170] sm:$0xff]
    %v1930 = vld [vmem:[#allocation8 + $0x178] sm:$0xff]
    %v1931 = vld [vmem:[#allocation8 + $0x180] sm:$0xff]
    %v1932 = vld [vmem:[#allocation8 + $0x188] sm:$0xff]
    %v1933 = vld [vmem:[#allocation8 + $0x190] sm:$0xff]
    %v1934 = vld [vmem:[#allocation8 + $0x198] sm:$0xff]
    %v1935 = vld [vmem:[#allocation8 + $0x1a0] sm:$0xff]
    %v1936 = vld [vmem:[#allocation8 + $0x1a8] sm:$0xff]
    %v1937 = vld [vmem:[#allocation8 + $0x1b0] sm:$0xff]
    %v1938 = vld [vmem:[#allocation8 + $0x1b8] sm:$0xff]
    %v1939 = vld [vmem:[#allocation8 + $0x1c0] sm:$0xff]
    %v1940 = vld [vmem:[#allocation8 + $0x1c8] sm:$0xff]
    %v1941 = vld [vmem:[#allocation8 + $0x1d0] sm:$0xff]
    %v1942 = vld [vmem:[#allocation8 + $0x1d8] sm:$0xff]
    %v1943 = vld [vmem:[#allocation8 + $0x1e0] sm:$0xff]
    %v1944 = vld [vmem:[#allocation8 + $0x1e8] sm:$0xff]
    %v1945 = vld [vmem:[#allocation8 + $0x1f0] sm:$0xff]
    %v1946 = vld [vmem:[#allocation8 + $0x1f8] sm:$0xff]
    %v1947 = vld [vmem:[#allocation8 + $0x200] sm:$0xff]
    %v1948 = vld [vmem:[#allocation8 + $0x208] sm:$0xff]
    %v1949 = vld [vmem:[#allocation8 + $0x210] sm:$0xff]
    %v1950 = vld [vmem:[#allocation8 + $0x218] sm:$0xff]
    %v1951 = vld [vmem:[#allocation8 + $0x220] sm:$0xff]
    %v1952 = vld [vmem:[#allocation8 + $0x228] sm:$0xff]
    %v1953 = vld [vmem:[#allocation8 + $0x230] sm:$0xff]
    %v1954 = vld [vmem:[#allocation8 + $0x238] sm:$0xff]
    %v1955 = vld [vmem:[#allocation8 + $0x240] sm:$0xff]
    %v1956 = vld [vmem:[#allocation8 + $0x248] sm:$0xff]
    %v1957 = vld [vmem:[#allocation8 + $0x250] sm:$0xff]
    %v1958 = vld [vmem:[#allocation8 + $0x258] sm:$0xff]
    %v1959 = vld [vmem:[#allocation8 + $0x260] sm:$0xff]
    %v1960 = vld [vmem:[#allocation8 + $0x268] sm:$0xff]
    %v1961 = vld [vmem:[#allocation8 + $0x270] sm:$0xff]
    %v1962 = vld [vmem:[#allocation8 + $0x278] sm:$0xff]
    %v1963 = vld [vmem:[#allocation8 + $0x280] sm:$0xff]
    %v1964 = vld [vmem:[#allocation8 + $0x288] sm:$0xff]
    %v1965 = vld [vmem:[#allocation8 + $0x290] sm:$0xff]
    %v1966 = vld [vmem:[#allocation8 + $0x298] sm:$0xff]
    %v1967 = vld [vmem:[#allocation8 + $0x2a0] sm:$0xff]
    %v1968 = vld [vmem:[#allocation8 + $0x2a8] sm:$0xff]
    %v1969 = vld [vmem:[#allocation8 + $0x2b0] sm:$0xff]
    %v1970 = vld [vmem:[#allocation8 + $0x2b8] sm:$0xff]
    %v1971 = vld [vmem:[#allocation8 + $0x2c0] sm:$0xff]
    %v1972 = vld [vmem:[#allocation8 + $0x2c8] sm:$0xff]
    %v1973 = vld [vmem:[#allocation8 + $0x2d0] sm:$0xff]
    %v1974 = vld [vmem:[#allocation8 + $0x2d8] sm:$0xff]
    %v1975 = vld [vmem:[#allocation8 + $0x2e0] sm:$0xff]
    %v1976 = vld [vmem:[#allocation8 + $0x2e8] sm:$0xff]
    %v1977 = vld [vmem:[#allocation8 + $0x2f0] sm:$0xff]
    %v1978 = vld [vmem:[#allocation8 + $0x2f8] sm:$0xff]
    %v1979 = vld [vmem:[#allocation8 + $0x300] sm:$0xff]
    %v1980 = vld [vmem:[#allocation8 + $0x308] sm:$0xff]
    %v1981 = vld [vmem:[#allocation8 + $0x310] sm:$0xff]
    %v1982 = vld [vmem:[#allocation8 + $0x318] sm:$0xff]
    %v1983 = vld [vmem:[#allocation8 + $0x320] sm:$0xff]
    %v1984 = vld [vmem:[#allocation8 + $0x328] sm:$0xff]
    %v1985 = vld [vmem:[#allocation8 + $0x330] sm:$0xff]
    %v1986 = vld [vmem:[#allocation8 + $0x338] sm:$0xff]
    %v1987 = vld [vmem:[#allocation8 + $0x340] sm:$0xff]
    %v1988 = vld [vmem:[#allocation8 + $0x348] sm:$0xff]
    %v1989 = vld [vmem:[#allocation8 + $0x350] sm:$0xff]
    %v1990 = vld [vmem:[#allocation8 + $0x358] sm:$0xff]
    %v1991 = vld [vmem:[#allocation8 + $0x360] sm:$0xff]
    %v1992 = vld [vmem:[#allocation8 + $0x368] sm:$0xff]
    %v1993 = vld [vmem:[#allocation8 + $0x370] sm:$0xff]
    %v1994 = vld [vmem:[#allocation8 + $0x378] sm:$0xff]
    %v1995 = vld [vmem:[#allocation8 + $0x380] sm:$0xff]
    %v1996 = vld [vmem:[#allocation8 + $0x388] sm:$0xff]
    %v1997 = vld [vmem:[#allocation8 + $0x390] sm:$0xff]
    %v1998 = vld [vmem:[#allocation8 + $0x398] sm:$0xff]
    %v1999 = vld [vmem:[#allocation8 + $0x3a0] sm:$0xff]
    %v2000 = vld [vmem:[#allocation8 + $0x3a8] sm:$0xff]
    %v2001 = vld [vmem:[#allocation8 + $0x3b0] sm:$0xff]
    %v2002 = vld [vmem:[#allocation8 + $0x3b8] sm:$0xff]
    %v2003 = vld [vmem:[#allocation8 + $0x3c0] sm:$0xff]
    %v2004 = vld [vmem:[#allocation8 + $0x3c8] sm:$0xff]
    %v2005 = vld [vmem:[#allocation8 + $0x3d0] sm:$0xff]
    %v2006 = vld [vmem:[#allocation8 + $0x3d8] sm:$0xff]
    %v2007 = vld [vmem:[#allocation8 + $0x3e0] sm:$0xff]
    %v2008 = vld [vmem:[#allocation8 + $0x3e8] sm:$0xff]
    %v2009 = vld [vmem:[#allocation8 + $0x3f0] sm:$0xff]
    %v2010 = vld [vmem:[#allocation8 + $0x3f8] sm:$0xff]
    %v2011 = vld [vmem:[#allocation10] sm:$0xf]
    %v2013 = vlaneseq
    %v2014 = vshrl.u32 %v2013, 7
    %v2015 = vsub.s32 0, %v2014
    %v2016 = vrot.slane %v2011, %v2015
    %v2017 = vlaneseq
    %v2018 = vshrl.u32 %v2017, 7
    %v2019 = vsub.s32 1, %v2018
    %v2020 = vrot.slane %v2011, %v2019
    %v2021 = vlaneseq
    %v2022 = vshrl.u32 %v2021, 7
    %v2023 = vsub.s32 2, %v2022
    %v2024 = vrot.slane %v2011, %v2023
    %v2025 = vlaneseq
    %v2026 = vshrl.u32 %v2025, 7
    %v2027 = vsub.s32 3, %v2026
    %v2028 = vrot.slane %v2011, %v2027
    %v2161 = vunpack.c.l.b16 %v1883
    %v2162 = vunpack.c.h.b16 %v1883
    %v2163 = vunpack.c.l.b16 %v1884
    %v2164 = vunpack.c.h.b16 %v1884
    %v2165 = vunpack.c.l.b16 %v1885
    %v2166 = vunpack.c.h.b16 %v1885
    %v2167 = vunpack.c.l.b16 %v1886
    %v2168 = vunpack.c.h.b16 %v1886
    %v2169 = vunpack.c.l.b16 %v1887
    %v2170 = vunpack.c.h.b16 %v1887
    %v2171 = vunpack.c.l.b16 %v1888
    %v2172 = vunpack.c.h.b16 %v1888
    %v2173 = vunpack.c.l.b16 %v1889
    %v2174 = vunpack.c.h.b16 %v1889
    %v2175 = vunpack.c.l.b16 %v1890
    %v2176 = vunpack.c.h.b16 %v1890
    %v2177 = vunpack.c.l.b16 %v1891
    %v2178 = vunpack.c.h.b16 %v1891
    %v2179 = vunpack.c.l.b16 %v1892
    %v2180 = vunpack.c.h.b16 %v1892
    %v2181 = vunpack.c.l.b16 %v1893
    %v2182 = vunpack.c.h.b16 %v1893
    %v2183 = vunpack.c.l.b16 %v1894
    %v2184 = vunpack.c.h.b16 %v1894
    %v2185 = vunpack.c.l.b16 %v1895
    %v2186 = vunpack.c.h.b16 %v1895
    %v2187 = vunpack.c.l.b16 %v1896
    %v2188 = vunpack.c.h.b16 %v1896
    %v2189 = vunpack.c.l.b16 %v1897
    %v2190 = vunpack.c.h.b16 %v1897
    %v2191 = vunpack.c.l.b16 %v1898
    %v2192 = vunpack.c.h.b16 %v1898
    %v2193 = vunpack.c.l.b16 %v1899
    %v2194 = vunpack.c.h.b16 %v1899
    %v2195 = vunpack.c.l.b16 %v1900
    %v2196 = vunpack.c.h.b16 %v1900
    %v2197 = vunpack.c.l.b16 %v1901
    %v2198 = vunpack.c.h.b16 %v1901
    %v2199 = vunpack.c.l.b16 %v1902
    %v2200 = vunpack.c.h.b16 %v1902
    %v2201 = vunpack.c.l.b16 %v1903
    %v2202 = vunpack.c.h.b16 %v1903
    %v2203 = vunpack.c.l.b16 %v1904
    %v2204 = vunpack.c.h.b16 %v1904
    %v2205 = vunpack.c.l.b16 %v1905
    %v2206 = vunpack.c.h.b16 %v1905
    %v2207 = vunpack.c.l.b16 %v1906
    %v2208 = vunpack.c.h.b16 %v1906
    %v2209 = vunpack.c.l.b16 %v1907
    %v2210 = vunpack.c.h.b16 %v1907
    %v2211 = vunpack.c.l.b16 %v1908
    %v2212 = vunpack.c.h.b16 %v1908
    %v2213 = vunpack.c.l.b16 %v1909
    %v2214 = vunpack.c.h.b16 %v1909
    %v2215 = vunpack.c.l.b16 %v1910
    %v2216 = vunpack.c.h.b16 %v1910
    %v2217 = vunpack.c.l.b16 %v1911
    %v2218 = vunpack.c.h.b16 %v1911
    %v2219 = vunpack.c.l.b16 %v1912
    %v2220 = vunpack.c.h.b16 %v1912
    %v2221 = vunpack.c.l.b16 %v1913
    %v2222 = vunpack.c.h.b16 %v1913
    %v2223 = vunpack.c.l.b16 %v1914
    %v2224 = vunpack.c.h.b16 %v1914
    %v2225 = vunpack.c.l.b16 %v1915
    %v2226 = vunpack.c.h.b16 %v1915
    %v2227 = vunpack.c.l.b16 %v1916
    %v2228 = vunpack.c.h.b16 %v1916
    %v2229 = vunpack.c.l.b16 %v1917
    %v2230 = vunpack.c.h.b16 %v1917
    %v2231 = vunpack.c.l.b16 %v1918
    %v2232 = vunpack.c.h.b16 %v1918
    %v2233 = vunpack.c.l.b16 %v1919
    %v2234 = vunpack.c.h.b16 %v1919
    %v2235 = vunpack.c.l.b16 %v1920
    %v2236 = vunpack.c.h.b16 %v1920
    %v2237 = vunpack.c.l.b16 %v1921
    %v2238 = vunpack.c.h.b16 %v1921
    %v2239 = vunpack.c.l.b16 %v1922
    %v2240 = vunpack.c.h.b16 %v1922
    %v2241 = vunpack.c.l.b16 %v1923
    %v2242 = vunpack.c.h.b16 %v1923
    %v2243 = vunpack.c.l.b16 %v1924
    %v2244 = vunpack.c.h.b16 %v1924
    %v2245 = vunpack.c.l.b16 %v1925
    %v2246 = vunpack.c.h.b16 %v1925
    %v2247 = vunpack.c.l.b16 %v1926
    %v2248 = vunpack.c.h.b16 %v1926
    %v2249 = vunpack.c.l.b16 %v1927
    %v2250 = vunpack.c.h.b16 %v1927
    %v2251 = vunpack.c.l.b16 %v1928
    %v2252 = vunpack.c.h.b16 %v1928
    %v2253 = vunpack.c.l.b16 %v1929
    %v2254 = vunpack.c.h.b16 %v1929
    %v2255 = vunpack.c.l.b16 %v1930
    %v2256 = vunpack.c.h.b16 %v1930
    %v2257 = vunpack.c.l.b16 %v1931
    %v2258 = vunpack.c.h.b16 %v1931
    %v2259 = vunpack.c.l.b16 %v1932
    %v2260 = vunpack.c.h.b16 %v1932
    %v2261 = vunpack.c.l.b16 %v1933
    %v2262 = vunpack.c.h.b16 %v1933
    %v2263 = vunpack.c.l.b16 %v1934
    %v2264 = vunpack.c.h.b16 %v1934
    %v2265 = vunpack.c.l.b16 %v1935
    %v2266 = vunpack.c.h.b16 %v1935
    %v2267 = vunpack.c.l.b16 %v1936
    %v2268 = vunpack.c.h.b16 %v1936
    %v2269 = vunpack.c.l.b16 %v1937
    %v2270 = vunpack.c.h.b16 %v1937
    %v2271 = vunpack.c.l.b16 %v1938
    %v2272 = vunpack.c.h.b16 %v1938
    %v2273 = vunpack.c.l.b16 %v1939
    %v2274 = vunpack.c.h.b16 %v1939
    %v2275 = vunpack.c.l.b16 %v1940
    %v2276 = vunpack.c.h.b16 %v1940
    %v2277 = vunpack.c.l.b16 %v1941
    %v2278 = vunpack.c.h.b16 %v1941
    %v2279 = vunpack.c.l.b16 %v1942
    %v2280 = vunpack.c.h.b16 %v1942
    %v2281 = vunpack.c.l.b16 %v1943
    %v2282 = vunpack.c.h.b16 %v1943
    %v2283 = vunpack.c.l.b16 %v1944
    %v2284 = vunpack.c.h.b16 %v1944
    %v2285 = vunpack.c.l.b16 %v1945
    %v2286 = vunpack.c.h.b16 %v1945
    %v2287 = vunpack.c.l.b16 %v1946
    %v2288 = vunpack.c.h.b16 %v1946
    %v2289 = vunpack.c.l.b16 %v1947
    %v2290 = vunpack.c.h.b16 %v1947
    %v2291 = vunpack.c.l.b16 %v1948
    %v2292 = vunpack.c.h.b16 %v1948
    %v2293 = vunpack.c.l.b16 %v1949
    %v2294 = vunpack.c.h.b16 %v1949
    %v2295 = vunpack.c.l.b16 %v1950
    %v2296 = vunpack.c.h.b16 %v1950
    %v2297 = vunpack.c.l.b16 %v1951
    %v2298 = vunpack.c.h.b16 %v1951
    %v2299 = vunpack.c.l.b16 %v1952
    %v2300 = vunpack.c.h.b16 %v1952
    %v2301 = vunpack.c.l.b16 %v1953
    %v2302 = vunpack.c.h.b16 %v1953
    %v2303 = vunpack.c.l.b16 %v1954
    %v2304 = vunpack.c.h.b16 %v1954
    %v2305 = vunpack.c.l.b16 %v1955
    %v2306 = vunpack.c.h.b16 %v1955
    %v2307 = vunpack.c.l.b16 %v1956
    %v2308 = vunpack.c.h.b16 %v1956
    %v2309 = vunpack.c.l.b16 %v1957
    %v2310 = vunpack.c.h.b16 %v1957
    %v2311 = vunpack.c.l.b16 %v1958
    %v2312 = vunpack.c.h.b16 %v1958
    %v2313 = vunpack.c.l.b16 %v1959
    %v2314 = vunpack.c.h.b16 %v1959
    %v2315 = vunpack.c.l.b16 %v1960
    %v2316 = vunpack.c.h.b16 %v1960
    %v2317 = vunpack.c.l.b16 %v1961
    %v2318 = vunpack.c.h.b16 %v1961
    %v2319 = vunpack.c.l.b16 %v1962
    %v2320 = vunpack.c.h.b16 %v1962
    %v2321 = vunpack.c.l.b16 %v1963
    %v2322 = vunpack.c.h.b16 %v1963
    %v2323 = vunpack.c.l.b16 %v1964
    %v2324 = vunpack.c.h.b16 %v1964
    %v2325 = vunpack.c.l.b16 %v1965
    %v2326 = vunpack.c.h.b16 %v1965
    %v2327 = vunpack.c.l.b16 %v1966
    %v2328 = vunpack.c.h.b16 %v1966
    %v2329 = vunpack.c.l.b16 %v1967
    %v2330 = vunpack.c.h.b16 %v1967
    %v2331 = vunpack.c.l.b16 %v1968
    %v2332 = vunpack.c.h.b16 %v1968
    %v2333 = vunpack.c.l.b16 %v1969
    %v2334 = vunpack.c.h.b16 %v1969
    %v2335 = vunpack.c.l.b16 %v1970
    %v2336 = vunpack.c.h.b16 %v1970
    %v2337 = vunpack.c.l.b16 %v1971
    %v2338 = vunpack.c.h.b16 %v1971
    %v2339 = vunpack.c.l.b16 %v1972
    %v2340 = vunpack.c.h.b16 %v1972
    %v2341 = vunpack.c.l.b16 %v1973
    %v2342 = vunpack.c.h.b16 %v1973
    %v2343 = vunpack.c.l.b16 %v1974
    %v2344 = vunpack.c.h.b16 %v1974
    %v2345 = vunpack.c.l.b16 %v1975
    %v2346 = vunpack.c.h.b16 %v1975
    %v2347 = vunpack.c.l.b16 %v1976
    %v2348 = vunpack.c.h.b16 %v1976
    %v2349 = vunpack.c.l.b16 %v1977
    %v2350 = vunpack.c.h.b16 %v1977
    %v2351 = vunpack.c.l.b16 %v1978
    %v2352 = vunpack.c.h.b16 %v1978
    %v2353 = vunpack.c.l.b16 %v1979
    %v2354 = vunpack.c.h.b16 %v1979
    %v2355 = vunpack.c.l.b16 %v1980
    %v2356 = vunpack.c.h.b16 %v1980
    %v2357 = vunpack.c.l.b16 %v1981
    %v2358 = vunpack.c.h.b16 %v1981
    %v2359 = vunpack.c.l.b16 %v1982
    %v2360 = vunpack.c.h.b16 %v1982
    %v2361 = vunpack.c.l.b16 %v1983
    %v2362 = vunpack.c.h.b16 %v1983
    %v2363 = vunpack.c.l.b16 %v1984
    %v2364 = vunpack.c.h.b16 %v1984
    %v2365 = vunpack.c.l.b16 %v1985
    %v2366 = vunpack.c.h.b16 %v1985
    %v2367 = vunpack.c.l.b16 %v1986
    %v2368 = vunpack.c.h.b16 %v1986
    %v2369 = vunpack.c.l.b16 %v1987
    %v2370 = vunpack.c.h.b16 %v1987
    %v2371 = vunpack.c.l.b16 %v1988
    %v2372 = vunpack.c.h.b16 %v1988
    %v2373 = vunpack.c.l.b16 %v1989
    %v2374 = vunpack.c.h.b16 %v1989
    %v2375 = vunpack.c.l.b16 %v1990
    %v2376 = vunpack.c.h.b16 %v1990
    %v2377 = vunpack.c.l.b16 %v1991
    %v2378 = vunpack.c.h.b16 %v1991
    %v2379 = vunpack.c.l.b16 %v1992
    %v2380 = vunpack.c.h.b16 %v1992
    %v2381 = vunpack.c.l.b16 %v1993
    %v2382 = vunpack.c.h.b16 %v1993
    %v2383 = vunpack.c.l.b16 %v1994
    %v2384 = vunpack.c.h.b16 %v1994
    %v2385 = vunpack.c.l.b16 %v1995
    %v2386 = vunpack.c.h.b16 %v1995
    %v2387 = vunpack.c.l.b16 %v1996
    %v2388 = vunpack.c.h.b16 %v1996
    %v2389 = vunpack.c.l.b16 %v1997
    %v2390 = vunpack.c.h.b16 %v1997
    %v2391 = vunpack.c.l.b16 %v1998
    %v2392 = vunpack.c.h.b16 %v1998
    %v2393 = vunpack.c.l.b16 %v1999
    %v2394 = vunpack.c.h.b16 %v1999
    %v2395 = vunpack.c.l.b16 %v2000
    %v2396 = vunpack.c.h.b16 %v2000
    %v2397 = vunpack.c.l.b16 %v2001
    %v2398 = vunpack.c.h.b16 %v2001
    %v2399 = vunpack.c.l.b16 %v2002
    %v2400 = vunpack.c.h.b16 %v2002
    %v2401 = vunpack.c.l.b16 %v2003
    %v2402 = vunpack.c.h.b16 %v2003
    %v2403 = vunpack.c.l.b16 %v2004
    %v2404 = vunpack.c.h.b16 %v2004
    %v2405 = vunpack.c.l.b16 %v2005
    %v2406 = vunpack.c.h.b16 %v2005
    %v2407 = vunpack.c.l.b16 %v2006
    %v2408 = vunpack.c.h.b16 %v2006
    %v2409 = vunpack.c.l.b16 %v2007
    %v2410 = vunpack.c.h.b16 %v2007
    %v2411 = vunpack.c.l.b16 %v2008
    %v2412 = vunpack.c.h.b16 %v2008
    %v2413 = vunpack.c.l.b16 %v2009
    %v2414 = vunpack.c.h.b16 %v2009
    %v2415 = vunpack.c.l.b16 %v2010
    %v2416 = vunpack.c.h.b16 %v2010
    %v2417 = vpack.c.b16 %v2165, %v2161
    %v2418 = vpack.c.b16 %v2166, %v2162
    %v2419 = vpack.c.b16 %v2167, %v2163
    %v2420 = vpack.c.b16 %v2168, %v2164
    %v2421 = vpack.c.b16 %v2173, %v2169
    %v2422 = vpack.c.b16 %v2174, %v2170
    %v2423 = vpack.c.b16 %v2175, %v2171
    %v2424 = vpack.c.b16 %v2176, %v2172
    %v2425 = vpack.c.b16 %v2181, %v2177
    %v2426 = vpack.c.b16 %v2182, %v2178
    %v2427 = vpack.c.b16 %v2183, %v2179
    %v2428 = vpack.c.b16 %v2184, %v2180
    %v2429 = vpack.c.b16 %v2189, %v2185
    %v2430 = vpack.c.b16 %v2190, %v2186
    %v2431 = vpack.c.b16 %v2191, %v2187
    %v2432 = vpack.c.b16 %v2192, %v2188
    %v2433 = vpack.c.b16 %v2197, %v2193
    %v2434 = vpack.c.b16 %v2198, %v2194
    %v2435 = vpack.c.b16 %v2199, %v2195
    %v2436 = vpack.c.b16 %v2200, %v2196
    %v2437 = vpack.c.b16 %v2205, %v2201
    %v2438 = vpack.c.b16 %v2206, %v2202
    %v2439 = vpack.c.b16 %v2207, %v2203
    %v2440 = vpack.c.b16 %v2208, %v2204
    %v2441 = vpack.c.b16 %v2213, %v2209
    %v2442 = vpack.c.b16 %v2214, %v2210
    %v2443 = vpack.c.b16 %v2215, %v2211
    %v2444 = vpack.c.b16 %v2216, %v2212
    %v2445 = vpack.c.b16 %v2221, %v2217
    %v2446 = vpack.c.b16 %v2222, %v2218
    %v2447 = vpack.c.b16 %v2223, %v2219
    %v2448 = vpack.c.b16 %v2224, %v2220
    %v2449 = vpack.c.b16 %v2229, %v2225
    %v2450 = vpack.c.b16 %v2230, %v2226
    %v2451 = vpack.c.b16 %v2231, %v2227
    %v2452 = vpack.c.b16 %v2232, %v2228
    %v2453 = vpack.c.b16 %v2237, %v2233
    %v2454 = vpack.c.b16 %v2238, %v2234
    %v2455 = vpack.c.b16 %v2239, %v2235
    %v2456 = vpack.c.b16 %v2240, %v2236
    %v2457 = vpack.c.b16 %v2245, %v2241
    %v2458 = vpack.c.b16 %v2246, %v2242
    %v2459 = vpack.c.b16 %v2247, %v2243
    %v2460 = vpack.c.b16 %v2248, %v2244
    %v2461 = vpack.c.b16 %v2253, %v2249
    %v2462 = vpack.c.b16 %v2254, %v2250
    %v2463 = vpack.c.b16 %v2255, %v2251
    %v2464 = vpack.c.b16 %v2256, %v2252
    %v2465 = vpack.c.b16 %v2261, %v2257
    %v2466 = vpack.c.b16 %v2262, %v2258
    %v2467 = vpack.c.b16 %v2263, %v2259
    %v2468 = vpack.c.b16 %v2264, %v2260
    %v2469 = vpack.c.b16 %v2269, %v2265
    %v2470 = vpack.c.b16 %v2270, %v2266
    %v2471 = vpack.c.b16 %v2271, %v2267
    %v2472 = vpack.c.b16 %v2272, %v2268
    %v2473 = vpack.c.b16 %v2277, %v2273
    %v2474 = vpack.c.b16 %v2278, %v2274
    %v2475 = vpack.c.b16 %v2279, %v2275
    %v2476 = vpack.c.b16 %v2280, %v2276
    %v2477 = vpack.c.b16 %v2285, %v2281
    %v2478 = vpack.c.b16 %v2286, %v2282
    %v2479 = vpack.c.b16 %v2287, %v2283
    %v2480 = vpack.c.b16 %v2288, %v2284
    %v2481 = vpack.c.b16 %v2293, %v2289
    %v2482 = vpack.c.b16 %v2294, %v2290
    %v2483 = vpack.c.b16 %v2295, %v2291
    %v2484 = vpack.c.b16 %v2296, %v2292
    %v2485 = vpack.c.b16 %v2301, %v2297
    %v2486 = vpack.c.b16 %v2302, %v2298
    %v2487 = vpack.c.b16 %v2303, %v2299
    %v2488 = vpack.c.b16 %v2304, %v2300
    %v2489 = vpack.c.b16 %v2309, %v2305
    %v2490 = vpack.c.b16 %v2310, %v2306
    %v2491 = vpack.c.b16 %v2311, %v2307
    %v2492 = vpack.c.b16 %v2312, %v2308
    %v2493 = vpack.c.b16 %v2317, %v2313
    %v2494 = vpack.c.b16 %v2318, %v2314
    %v2495 = vpack.c.b16 %v2319, %v2315
    %v2496 = vpack.c.b16 %v2320, %v2316
    %v2497 = vpack.c.b16 %v2325, %v2321
    %v2498 = vpack.c.b16 %v2326, %v2322
    %v2499 = vpack.c.b16 %v2327, %v2323
    %v2500 = vpack.c.b16 %v2328, %v2324
    %v2501 = vpack.c.b16 %v2333, %v2329
    %v2502 = vpack.c.b16 %v2334, %v2330
    %v2503 = vpack.c.b16 %v2335, %v2331
    %v2504 = vpack.c.b16 %v2336, %v2332
    %v2505 = vpack.c.b16 %v2341, %v2337
    %v2506 = vpack.c.b16 %v2342, %v2338
    %v2507 = vpack.c.b16 %v2343, %v2339
    %v2508 = vpack.c.b16 %v2344, %v2340
    %v2509 = vpack.c.b16 %v2349, %v2345
    %v2510 = vpack.c.b16 %v2350, %v2346
    %v2511 = vpack.c.b16 %v2351, %v2347
    %v2512 = vpack.c.b16 %v2352, %v2348
    %v2513 = vpack.c.b16 %v2357, %v2353
    %v2514 = vpack.c.b16 %v2358, %v2354
    %v2515 = vpack.c.b16 %v2359, %v2355
    %v2516 = vpack.c.b16 %v2360, %v2356
    %v2517 = vpack.c.b16 %v2365, %v2361
    %v2518 = vpack.c.b16 %v2366, %v2362
    %v2519 = vpack.c.b16 %v2367, %v2363
    %v2520 = vpack.c.b16 %v2368, %v2364
    %v2521 = vpack.c.b16 %v2373, %v2369
    %v2522 = vpack.c.b16 %v2374, %v2370
    %v2523 = vpack.c.b16 %v2375, %v2371
    %v2524 = vpack.c.b16 %v2376, %v2372
    %v2525 = vpack.c.b16 %v2381, %v2377
    %v2526 = vpack.c.b16 %v2382, %v2378
    %v2527 = vpack.c.b16 %v2383, %v2379
    %v2528 = vpack.c.b16 %v2384, %v2380
    %v2529 = vpack.c.b16 %v2389, %v2385
    %v2530 = vpack.c.b16 %v2390, %v2386
    %v2531 = vpack.c.b16 %v2391, %v2387
    %v2532 = vpack.c.b16 %v2392, %v2388
    %v2533 = vpack.c.b16 %v2397, %v2393
    %v2534 = vpack.c.b16 %v2398, %v2394
    %v2535 = vpack.c.b16 %v2399, %v2395
    %v2536 = vpack.c.b16 %v2400, %v2396
    %v2537 = vpack.c.b16 %v2405, %v2401
    %v2538 = vpack.c.b16 %v2406, %v2402
    %v2539 = vpack.c.b16 %v2407, %v2403
    %v2540 = vpack.c.b16 %v2408, %v2404
    %v2541 = vpack.c.b16 %v2413, %v2409
    %v2542 = vpack.c.b16 %v2414, %v2410
    %v2543 = vpack.c.b16 %v2415, %v2411
    %v2544 = vpack.c.b16 %v2416, %v2412
    %2673 = vmatprep.subr.bf16.mxu0 %v2418
    %2674 = vmatpush1.bf16.msra.mxu0 %v2417
    %2675 = vmatprep.subr.bf16.mxu0 %v2422
    %2676 = vmatpush1.bf16.msra.mxu0 %v2421
    %2677 = vmatprep.subr.bf16.mxu0 %v2426
    %2678 = vmatpush1.bf16.msra.mxu0 %v2425
    %2679 = vmatprep.subr.bf16.mxu0 %v2430
    %2680 = vmatpush1.bf16.msra.mxu0 %v2429
    %2681 = vmatprep.subr.bf16.mxu0 %v2434
    %2682 = vmatpush1.bf16.msra.mxu0 %v2433
    %2683 = vmatprep.subr.bf16.mxu0 %v2438
    %2684 = vmatpush1.bf16.msra.mxu0 %v2437
    %2685 = vmatprep.subr.bf16.mxu0 %v2442
    %2686 = vmatpush1.bf16.msra.mxu0 %v2441
    %2687 = vmatprep.subr.bf16.mxu0 %v2446
    %2688 = vmatpush1.bf16.msra.mxu0 %v2445
    %2689 = vmatprep.subr.bf16.mxu0 %v2450
    %2690 = vmatpush1.bf16.msra.mxu0 %v2449
    %2691 = vmatprep.subr.bf16.mxu0 %v2454
    %2692 = vmatpush1.bf16.msra.mxu0 %v2453
    %2693 = vmatprep.subr.bf16.mxu0 %v2458
    %2694 = vmatpush1.bf16.msra.mxu0 %v2457
    %2695 = vmatprep.subr.bf16.mxu0 %v2462
    %2696 = vmatpush1.bf16.msra.mxu0 %v2461
    %2697 = vmatprep.subr.bf16.mxu0 %v2466
    %2698 = vmatpush1.bf16.msra.mxu0 %v2465
    %2699 = vmatprep.subr.bf16.mxu0 %v2470
    %2700 = vmatpush1.bf16.msra.mxu0 %v2469
    %2701 = vmatprep.subr.bf16.mxu0 %v2474
    %2702 = vmatpush1.bf16.msra.mxu0 %v2473
    %2703 = vmatprep.subr.bf16.mxu0 %v2478
    %2704 = vmatpush1.bf16.msra.mxu0 %v2477
    %2705 = vmatprep.mubr.bf16.mxu0 %v1880
    %2706 = vmatmul.mubr.bf16.gmra.mrb[0].mxu0 %v1879
    %v2707 = vpop.f32.mrb[0].mxu0
    %v2708 = vadd.f32 %v2016, %v2707
    %v2709 = vpop.f32.mrb[0].mxu0
    %v2710 = vadd.f32 %v2020, %v2709
    %v2711 = vpop.f32.mrb[0].mxu0
    %v2712 = vadd.f32 %v2016, %v2711
    %v2713 = vpop.f32.mrb[0].mxu0
    %v2714 = vadd.f32 %v2020, %v2713
    %2715 = vdwg.mxu0
    %2716 = vmatprep.subr.bf16.mxu0 %v2482
    %2717 = vmatpush1.bf16.msra.mxu0 %v2481
    %2718 = vmatprep.subr.bf16.mxu0 %v2486
    %2719 = vmatpush1.bf16.msra.mxu0 %v2485
    %2720 = vmatprep.subr.bf16.mxu0 %v2490
    %2721 = vmatpush1.bf16.msra.mxu0 %v2489
    %2722 = vmatprep.subr.bf16.mxu0 %v2494
    %2723 = vmatpush1.bf16.msra.mxu0 %v2493
    %2724 = vmatprep.subr.bf16.mxu0 %v2498
    %2725 = vmatpush1.bf16.msra.mxu0 %v2497
    %2726 = vmatprep.subr.bf16.mxu0 %v2502
    %2727 = vmatpush1.bf16.msra.mxu0 %v2501
    %2728 = vmatprep.subr.bf16.mxu0 %v2506
    %2729 = vmatpush1.bf16.msra.mxu0 %v2505
    %2730 = vmatprep.subr.bf16.mxu0 %v2510
    %2731 = vmatpush1.bf16.msra.mxu0 %v2509
    %2732 = vmatprep.subr.bf16.mxu0 %v2514
    %2733 = vmatpush1.bf16.msra.mxu0 %v2513
    %2734 = vmatprep.subr.bf16.mxu0 %v2518
    %2735 = vmatpush1.bf16.msra.mxu0 %v2517
    %2736 = vmatprep.subr.bf16.mxu0 %v2522
    %2737 = vmatpush1.bf16.msra.mxu0 %v2521
    %2738 = vmatprep.subr.bf16.mxu0 %v2526
    %2739 = vmatpush1.bf16.msra.mxu0 %v2525
    %2740 = vmatprep.subr.bf16.mxu0 %v2530
    %2741 = vmatpush1.bf16.msra.mxu0 %v2529
    %2742 = vmatprep.subr.bf16.mxu0 %v2534
    %2743 = vmatpush1.bf16.msra.mxu0 %v2533
    %2744 = vmatprep.subr.bf16.mxu0 %v2538
    %2745 = vmatpush1.bf16.msra.mxu0 %v2537
    %2746 = vmatprep.subr.bf16.mxu0 %v2542
    %2747 = vmatpush1.bf16.msra.mxu0 %v2541
    %2748 = vmatprep.mubr.bf16.mxu0 %v1882
    %2749 = vmatmul.mubr.bf16.gmra.mrb[0].mxu0 %v1881
    %v2750 = vpop.f32.mrb[0].mxu0
    %v2751 = vadd.f32 %v2708, %v2750
    %v2752 = vpop.f32.mrb[0].mxu0
    %v2753 = vadd.f32 %v2710, %v2752
    %v2754 = vpop.f32.mrb[0].mxu0
    %v2755 = vadd.f32 %v2712, %v2754
    %v2756 = vpop.f32.mrb[0].mxu0
    %v2757 = vadd.f32 %v2714, %v2756
    %2758 = vdwg.mxu0
    %2759 = vmatprep.subr.bf16.mxu0 %v2420
    %2760 = vmatpush1.bf16.msra.mxu0 %v2419
    %2761 = vmatprep.subr.bf16.mxu0 %v2424
    %2762 = vmatpush1.bf16.msra.mxu0 %v2423
    %2763 = vmatprep.subr.bf16.mxu0 %v2428
    %2764 = vmatpush1.bf16.msra.mxu0 %v2427
    %2765 = vmatprep.subr.bf16.mxu0 %v2432
    %2766 = vmatpush1.bf16.msra.mxu0 %v2431
    %2767 = vmatprep.subr.bf16.mxu0 %v2436
    %2768 = vmatpush1.bf16.msra.mxu0 %v2435
    %2769 = vmatprep.subr.bf16.mxu0 %v2440
    %2770 = vmatpush1.bf16.msra.mxu0 %v2439
    %2771 = vmatprep.subr.bf16.mxu0 %v2444
    %2772 = vmatpush1.bf16.msra.mxu0 %v2443
    %2773 = vmatprep.subr.bf16.mxu0 %v2448
    %2774 = vmatpush1.bf16.msra.mxu0 %v2447
    %2775 = vmatprep.subr.bf16.mxu0 %v2452
    %2776 = vmatpush1.bf16.msra.mxu0 %v2451
    %2777 = vmatprep.subr.bf16.mxu0 %v2456
    %2778 = vmatpush1.bf16.msra.mxu0 %v2455
    %2779 = vmatprep.subr.bf16.mxu0 %v2460
    %2780 = vmatpush1.bf16.msra.mxu0 %v2459
    %2781 = vmatprep.subr.bf16.mxu0 %v2464
    %2782 = vmatpush1.bf16.msra.mxu0 %v2463
    %2783 = vmatprep.subr.bf16.mxu0 %v2468
    %2784 = vmatpush1.bf16.msra.mxu0 %v2467
    %2785 = vmatprep.subr.bf16.mxu0 %v2472
    %2786 = vmatpush1.bf16.msra.mxu0 %v2471
    %2787 = vmatprep.subr.bf16.mxu0 %v2476
    %2788 = vmatpush1.bf16.msra.mxu0 %v2475
    %2789 = vmatprep.subr.bf16.mxu0 %v2480
    %2790 = vmatpush1.bf16.msra.mxu0 %v2479
    %2791 = vmatprep.mubr.bf16.mxu0 %v1880
    %2792 = vmatmul.mubr.bf16.gmra.mrb[0].mxu0 %v1879
    %v2793 = vpop.f32.mrb[0].mxu0
    %v2794 = vadd.f32 %v2024, %v2793
    %v2795 = vpop.f32.mrb[0].mxu0
    %v2796 = vadd.f32 %v2028, %v2795
    %v2797 = vpop.f32.mrb[0].mxu0
    %v2798 = vadd.f32 %v2024, %v2797
    %v2799 = vpop.f32.mrb[0].mxu0
    %v2800 = vadd.f32 %v2028, %v2799
    %2801 = vdwg.mxu0
    %2802 = vmatprep.subr.bf16.mxu0 %v2484
    %2803 = vmatpush1.bf16.msra.mxu0 %v2483
    %2804 = vmatprep.subr.bf16.mxu0 %v2488
    %2805 = vmatpush1.bf16.msra.mxu0 %v2487
    %2806 = vmatprep.subr.bf16.mxu0 %v2492
    %2807 = vmatpush1.bf16.msra.mxu0 %v2491
    %2808 = vmatprep.subr.bf16.mxu0 %v2496
    %2809 = vmatpush1.bf16.msra.mxu0 %v2495
    %2810 = vmatprep.subr.bf16.mxu0 %v2500
    %2811 = vmatpush1.bf16.msra.mxu0 %v2499
    %2812 = vmatprep.subr.bf16.mxu0 %v2504
    %2813 = vmatpush1.bf16.msra.mxu0 %v2503
    %2814 = vmatprep.subr.bf16.mxu0 %v2508
    %2815 = vmatpush1.bf16.msra.mxu0 %v2507
    %2816 = vmatprep.subr.bf16.mxu0 %v2512
    %2817 = vmatpush1.bf16.msra.mxu0 %v2511
    %2818 = vmatprep.subr.bf16.mxu0 %v2516
    %2819 = vmatpush1.bf16.msra.mxu0 %v2515
    %2820 = vmatprep.subr.bf16.mxu0 %v2520
    %2821 = vmatpush1.bf16.msra.mxu0 %v2519
    %2822 = vmatprep.subr.bf16.mxu0 %v2524
    %2823 = vmatpush1.bf16.msra.mxu0 %v2523
    %2824 = vmatprep.subr.bf16.mxu0 %v2528
    %2825 = vmatpush1.bf16.msra.mxu0 %v2527
    %2826 = vmatprep.subr.bf16.mxu0 %v2532
    %2827 = vmatpush1.bf16.msra.mxu0 %v2531
    %2828 = vmatprep.subr.bf16.mxu0 %v2536
    %2829 = vmatpush1.bf16.msra.mxu0 %v2535
    %2830 = vmatprep.subr.bf16.mxu0 %v2540
    %2831 = vmatpush1.bf16.msra.mxu0 %v2539
    %2832 = vmatprep.subr.bf16.mxu0 %v2544
    %2833 = vmatpush1.bf16.msra.mxu0 %v2543
    %2834 = vmatprep.mubr.bf16.mxu0 %v1882
    %2835 = vmatmul.mubr.bf16.gmra.mrb[0].mxu0 %v1881
    %v2836 = vpop.f32.mrb[0].mxu0
    %v2837 = vadd.f32 %v2794, %v2836
    %v2838 = vpop.f32.mrb[0].mxu0
    %v2839 = vadd.f32 %v2796, %v2838
    %v2840 = vpop.f32.mrb[0].mxu0
    %v2841 = vadd.f32 %v2798, %v2840
    %v2842 = vpop.f32.mrb[0].mxu0
    %v2843 = vadd.f32 %v2800, %v2842
    %2844 = vdwg.mxu0
    %v2845 = vmax.f32 %v2751, 0.0
    %v2846 = vmax.f32 %v2753, 0.0
    %v2847 = vmax.f32 %v2837, 0.0
    %v2848 = vmax.f32 %v2839, 0.0
    %v2849 = vmax.f32 %v2755, 0.0
    %v2850 = vmax.f32 %v2757, 0.0
    %v2851 = vmax.f32 %v2841, 0.0
    %v2852 = vmax.f32 %v2843, 0.0
    %v2853 = vpack.c.bf16 %v2849, %v2845
    %v2854 = vpack.c.bf16 %v2850, %v2846
    %v2855 = vpack.c.bf16 %v2851, %v2847
    %v2856 = vpack.c.bf16 %v2852, %v2848
    %v2857 = vld [vmem:[#allocation11] sm:$0xf]
    %v2858 = vld [vmem:[#allocation11 + $0x4] sm:$0xf]
    %v2859 = vld [vmem:[#allocation11 + $0x8] sm:$0xf]
    %v2860 = vld [vmem:[#allocation11 + $0xc] sm:$0xf]
    %v2861 = vld [vmem:[#allocation11 + $0x10] sm:$0xf]
    %v2862 = vld [vmem:[#allocation11 + $0x14] sm:$0xf]
    %v2863 = vld [vmem:[#allocation11 + $0x18] sm:$0xf]
    %v2864 = vld [vmem:[#allocation11 + $0x1c] sm:$0xf]
    %v2865 = vld [vmem:[#allocation11 + $0x20] sm:$0xf]
    %v2866 = vld [vmem:[#allocation11 + $0x24] sm:$0xf]
    %v2867 = vld [vmem:[#allocation11 + $0x28] sm:$0xf]
    %v2868 = vld [vmem:[#allocation11 + $0x2c] sm:$0xf]
    %v2869 = vld [vmem:[#allocation11 + $0x30] sm:$0xf]
    %v2870 = vld [vmem:[#allocation11 + $0x34] sm:$0xf]
    %v2871 = vld [vmem:[#allocation11 + $0x38] sm:$0xf]
    %v2872 = vld [vmem:[#allocation11 + $0x3c] sm:$0xf]
    %v2873 = vld [vmem:[#allocation11 + $0x40] sm:$0xf]
    %v2874 = vld [vmem:[#allocation11 + $0x44] sm:$0xf]
    %v2875 = vld [vmem:[#allocation11 + $0x48] sm:$0xf]
    %v2876 = vld [vmem:[#allocation11 + $0x4c] sm:$0xf]
    %v2877 = vld [vmem:[#allocation11 + $0x50] sm:$0xf]
    %v2878 = vld [vmem:[#allocation11 + $0x54] sm:$0xf]
    %v2879 = vld [vmem:[#allocation11 + $0x58] sm:$0xf]
    %v2880 = vld [vmem:[#allocation11 + $0x5c] sm:$0xf]
    %v2881 = vld [vmem:[#allocation11 + $0x60] sm:$0xf]
    %v2882 = vld [vmem:[#allocation11 + $0x64] sm:$0xf]
    %v2883 = vld [vmem:[#allocation11 + $0x68] sm:$0xf]
    %v2884 = vld [vmem:[#allocation11 + $0x6c] sm:$0xf]
    %v2885 = vld [vmem:[#allocation11 + $0x70] sm:$0xf]
    %v2886 = vld [vmem:[#allocation11 + $0x74] sm:$0xf]
    %v2887 = vld [vmem:[#allocation11 + $0x78] sm:$0xf]
    %v2888 = vld [vmem:[#allocation11 + $0x7c] sm:$0xf]
    %v2889 = vld [vmem:[#allocation11 + $0x80] sm:$0xf]
    %v2890 = vld [vmem:[#allocation11 + $0x84] sm:$0xf]
    %v2891 = vld [vmem:[#allocation11 + $0x88] sm:$0xf]
    %v2892 = vld [vmem:[#allocation11 + $0x8c] sm:$0xf]
    %v2893 = vld [vmem:[#allocation11 + $0x90] sm:$0xf]
    %v2894 = vld [vmem:[#allocation11 + $0x94] sm:$0xf]
    %v2895 = vld [vmem:[#allocation11 + $0x98] sm:$0xf]
    %v2896 = vld [vmem:[#allocation11 + $0x9c] sm:$0xf]
    %v2897 = vld [vmem:[#allocation11 + $0xa0] sm:$0xf]
    %v2898 = vld [vmem:[#allocation11 + $0xa4] sm:$0xf]
    %v2899 = vld [vmem:[#allocation11 + $0xa8] sm:$0xf]
    %v2900 = vld [vmem:[#allocation11 + $0xac] sm:$0xf]
    %v2901 = vld [vmem:[#allocation11 + $0xb0] sm:$0xf]
    %v2902 = vld [vmem:[#allocation11 + $0xb4] sm:$0xf]
    %v2903 = vld [vmem:[#allocation11 + $0xb8] sm:$0xf]
    %v2904 = vld [vmem:[#allocation11 + $0xbc] sm:$0xf]
    %v2905 = vld [vmem:[#allocation11 + $0xc0] sm:$0xf]
    %v2906 = vld [vmem:[#allocation11 + $0xc4] sm:$0xf]
    %v2907 = vld [vmem:[#allocation11 + $0xc8] sm:$0xf]
    %v2908 = vld [vmem:[#allocation11 + $0xcc] sm:$0xf]
    %v2909 = vld [vmem:[#allocation11 + $0xd0] sm:$0xf]
    %v2910 = vld [vmem:[#allocation11 + $0xd4] sm:$0xf]
    %v2911 = vld [vmem:[#allocation11 + $0xd8] sm:$0xf]
    %v2912 = vld [vmem:[#allocation11 + $0xdc] sm:$0xf]
    %v2913 = vld [vmem:[#allocation11 + $0xe0] sm:$0xf]
    %v2914 = vld [vmem:[#allocation11 + $0xe4] sm:$0xf]
    %v2915 = vld [vmem:[#allocation11 + $0xe8] sm:$0xf]
    %v2916 = vld [vmem:[#allocation11 + $0xec] sm:$0xf]
    %v2917 = vld [vmem:[#allocation11 + $0xf0] sm:$0xf]
    %v2918 = vld [vmem:[#allocation11 + $0xf4] sm:$0xf]
    %v2919 = vld [vmem:[#allocation11 + $0xf8] sm:$0xf]
    %v2920 = vld [vmem:[#allocation11 + $0xfc] sm:$0xf]
    %v2921 = vld [vmem:[#allocation13] sm:$0x1]
    %v2923 = vlaneseq
    %v2924 = vshrl.u32 %v2923, 7
    %v2925 = vsub.s32 0, %v2924
    %v2926 = vrot.slane %v2921, %v2925
    %v2992 = vunpack.c.l.b16 %v2857
    %v2993 = vunpack.c.l.b16 %v2858
    %v2994 = vunpack.c.l.b16 %v2859
    %v2995 = vunpack.c.l.b16 %v2860
    %v2996 = vunpack.c.l.b16 %v2861
    %v2997 = vunpack.c.l.b16 %v2862
    %v2998 = vunpack.c.l.b16 %v2863
    %v2999 = vunpack.c.l.b16 %v2864
    %v3000 = vunpack.c.l.b16 %v2865
    %v3001 = vunpack.c.l.b16 %v2866
    %v3002 = vunpack.c.l.b16 %v2867
    %v3003 = vunpack.c.l.b16 %v2868
    %v3004 = vunpack.c.l.b16 %v2869
    %v3005 = vunpack.c.l.b16 %v2870
    %v3006 = vunpack.c.l.b16 %v2871
    %v3007 = vunpack.c.l.b16 %v2872
    %v3008 = vunpack.c.l.b16 %v2873
    %v3009 = vunpack.c.l.b16 %v2874
    %v3010 = vunpack.c.l.b16 %v2875
    %v3011 = vunpack.c.l.b16 %v2876
    %v3012 = vunpack.c.l.b16 %v2877
    %v3013 = vunpack.c.l.b16 %v2878
    %v3014 = vunpack.c.l.b16 %v2879
    %v3015 = vunpack.c.l.b16 %v2880
    %v3016 = vunpack.c.l.b16 %v2881
    %v3017 = vunpack.c.l.b16 %v2882
    %v3018 = vunpack.c.l.b16 %v2883
    %v3019 = vunpack.c.l.b16 %v2884
    %v3020 = vunpack.c.l.b16 %v2885
    %v3021 = vunpack.c.l.b16 %v2886
    %v3022 = vunpack.c.l.b16 %v2887
    %v3023 = vunpack.c.l.b16 %v2888
    %v3024 = vunpack.c.l.b16 %v2889
    %v3025 = vunpack.c.l.b16 %v2890
    %v3026 = vunpack.c.l.b16 %v2891
    %v3027 = vunpack.c.l.b16 %v2892
    %v3028 = vunpack.c.l.b16 %v2893
    %v3029 = vunpack.c.l.b16 %v2894
    %v3030 = vunpack.c.l.b16 %v2895
    %v3031 = vunpack.c.l.b16 %v2896
    %v3032 = vunpack.c.l.b16 %v2897
    %v3033 = vunpack.c.l.b16 %v2898
    %v3034 = vunpack.c.l.b16 %v2899
    %v3035 = vunpack.c.l.b16 %v2900
    %v3036 = vunpack.c.l.b16 %v2901
    %v3037 = vunpack.c.l.b16 %v2902
    %v3038 = vunpack.c.l.b16 %v2903
    %v3039 = vunpack.c.l.b16 %v2904
    %v3040 = vunpack.c.l.b16 %v2905
    %v3041 = vunpack.c.l.b16 %v2906
    %v3042 = vunpack.c.l.b16 %v2907
    %v3043 = vunpack.c.l.b16 %v2908
    %v3044 = vunpack.c.l.b16 %v2909
    %v3045 = vunpack.c.l.b16 %v2910
    %v3046 = vunpack.c.l.b16 %v2911
    %v3047 = vunpack.c.l.b16 %v2912
    %v3048 = vunpack.c.l.b16 %v2913
    %v3049 = vunpack.c.l.b16 %v2914
    %v3050 = vunpack.c.l.b16 %v2915
    %v3051 = vunpack.c.l.b16 %v2916
    %v3052 = vunpack.c.l.b16 %v2917
    %v3053 = vunpack.c.l.b16 %v2918
    %v3054 = vunpack.c.l.b16 %v2919
    %v3055 = vunpack.c.l.b16 %v2920
    %v3056 = vpack.c.b16 %v2993, %v2992
    %v3057 = vpack.c.b16 %v2995, %v2994
    %v3058 = vpack.c.b16 %v2997, %v2996
    %v3059 = vpack.c.b16 %v2999, %v2998
    %v3060 = vpack.c.b16 %v3001, %v3000
    %v3061 = vpack.c.b16 %v3003, %v3002
    %v3062 = vpack.c.b16 %v3005, %v3004
    %v3063 = vpack.c.b16 %v3007, %v3006
    %v3064 = vpack.c.b16 %v3009, %v3008
    %v3065 = vpack.c.b16 %v3011, %v3010
    %v3066 = vpack.c.b16 %v3013, %v3012
    %v3067 = vpack.c.b16 %v3015, %v3014
    %v3068 = vpack.c.b16 %v3017, %v3016
    %v3069 = vpack.c.b16 %v3019, %v3018
    %v3070 = vpack.c.b16 %v3021, %v3020
    %v3071 = vpack.c.b16 %v3023, %v3022
    %v3072 = vpack.c.b16 %v3025, %v3024
    %v3073 = vpack.c.b16 %v3027, %v3026
    %v3074 = vpack.c.b16 %v3029, %v3028
    %v3075 = vpack.c.b16 %v3031, %v3030
    %v3076 = vpack.c.b16 %v3033, %v3032
    %v3077 = vpack.c.b16 %v3035, %v3034
    %v3078 = vpack.c.b16 %v3037, %v3036
    %v3079 = vpack.c.b16 %v3039, %v3038
    %v3080 = vpack.c.b16 %v3041, %v3040
    %v3081 = vpack.c.b16 %v3043, %v3042
    %v3082 = vpack.c.b16 %v3045, %v3044
    %v3083 = vpack.c.b16 %v3047, %v3046
    %v3084 = vpack.c.b16 %v3049, %v3048
    %v3085 = vpack.c.b16 %v3051, %v3050
    %v3086 = vpack.c.b16 %v3053, %v3052
    %v3087 = vpack.c.b16 %v3055, %v3054
    %3120 = vmatprep.subr.bf16.mxu0 0
    %3121 = vmatpush1.bf16.msra.mxu0 %v3056
    %3122 = vmatprep.subr.bf16.mxu0 0
    %3123 = vmatpush1.bf16.msra.mxu0 %v3057
    %3124 = vmatprep.subr.bf16.mxu0 0
    %3125 = vmatpush1.bf16.msra.mxu0 %v3058
    %3126 = vmatprep.subr.bf16.mxu0 0
    %3127 = vmatpush1.bf16.msra.mxu0 %v3059
    %3128 = vmatprep.subr.bf16.mxu0 0
    %3129 = vmatpush1.bf16.msra.mxu0 %v3060
    %3130 = vmatprep.subr.bf16.mxu0 0
    %3131 = vmatpush1.bf16.msra.mxu0 %v3061
    %3132 = vmatprep.subr.bf16.mxu0 0
    %3133 = vmatpush1.bf16.msra.mxu0 %v3062
    %3134 = vmatprep.subr.bf16.mxu0 0
    %3135 = vmatpush1.bf16.msra.mxu0 %v3063
    %3136 = vmatprep.subr.bf16.mxu0 0
    %3137 = vmatpush1.bf16.msra.mxu0 %v3064
    %3138 = vmatprep.subr.bf16.mxu0 0
    %3139 = vmatpush1.bf16.msra.mxu0 %v3065
    %3140 = vmatprep.subr.bf16.mxu0 0
    %3141 = vmatpush1.bf16.msra.mxu0 %v3066
    %3142 = vmatprep.subr.bf16.mxu0 0
    %3143 = vmatpush1.bf16.msra.mxu0 %v3067
    %3144 = vmatprep.subr.bf16.mxu0 0
    %3145 = vmatpush1.bf16.msra.mxu0 %v3068
    %3146 = vmatprep.subr.bf16.mxu0 0
    %3147 = vmatpush1.bf16.msra.mxu0 %v3069
    %3148 = vmatprep.subr.bf16.mxu0 0
    %3149 = vmatpush1.bf16.msra.mxu0 %v3070
    %3150 = vmatprep.subr.bf16.mxu0 0
    %3151 = vmatpush1.bf16.msra.mxu0 %v3071
    %3152 = vmatprep.mubr.bf16.mxu0 %v2854
    %3153 = vmatmul.mubr.bf16.gmra.mrb[0].mxu0 %v2853
    %v3154 = vpop.f32.mrb[0].mxu0
    %v3155 = vadd.f32 %v2926, %v3154
    %v3156 = vpop.f32.mrb[0].mxu0
    %v3157 = vpop.f32.mrb[0].mxu0
    %v3158 = vadd.f32 %v2926, %v3157
    %v3159 = vpop.f32.mrb[0].mxu0
    %3160 = vdwg.mxu0
    %3161 = vmatprep.subr.bf16.mxu0 0
    %3162 = vmatpush1.bf16.msra.mxu0 %v3072
    %3163 = vmatprep.subr.bf16.mxu0 0
    %3164 = vmatpush1.bf16.msra.mxu0 %v3073
    %3165 = vmatprep.subr.bf16.mxu0 0
    %3166 = vmatpush1.bf16.msra.mxu0 %v3074
    %3167 = vmatprep.subr.bf16.mxu0 0
    %3168 = vmatpush1.bf16.msra.mxu0 %v3075
    %3169 = vmatprep.subr.bf16.mxu0 0
    %3170 = vmatpush1.bf16.msra.mxu0 %v3076
    %3171 = vmatprep.subr.bf16.mxu0 0
    %3172 = vmatpush1.bf16.msra.mxu0 %v3077
    %3173 = vmatprep.subr.bf16.mxu0 0
    %3174 = vmatpush1.bf16.msra.mxu0 %v3078
    %3175 = vmatprep.subr.bf16.mxu0 0
    %3176 = vmatpush1.bf16.msra.mxu0 %v3079
    %3177 = vmatprep.subr.bf16.mxu0 0
    %3178 = vmatpush1.bf16.msra.mxu0 %v3080
    %3179 = vmatprep.subr.bf16.mxu0 0
    %3180 = vmatpush1.bf16.msra.mxu0 %v3081
    %3181 = vmatprep.subr.bf16.mxu0 0
    %3182 = vmatpush1.bf16.msra.mxu0 %v3082
    %3183 = vmatprep.subr.bf16.mxu0 0
    %3184 = vmatpush1.bf16.msra.mxu0 %v3083
    %3185 = vmatprep.subr.bf16.mxu0 0
    %3186 = vmatpush1.bf16.msra.mxu0 %v3084
    %3187 = vmatprep.subr.bf16.mxu0 0
    %3188 = vmatpush1.bf16.msra.mxu0 %v3085
    %3189 = vmatprep.subr.bf16.mxu0 0
    %3190 = vmatpush1.bf16.msra.mxu0 %v3086
    %3191 = vmatprep.subr.bf16.mxu0 0
    %3192 = vmatpush1.bf16.msra.mxu0 %v3087
    %3193 = vmatprep.mubr.bf16.mxu0 %v2856
    %3194 = vmatmul.mubr.bf16.gmra.mrb[0].mxu0 %v2855
    %v3195 = vpop.f32.mrb[0].mxu0
    %v3196 = vadd.f32 %v3155, %v3195
    %v3197 = vpop.f32.mrb[0].mxu0
    %v3198 = vpop.f32.mrb[0].mxu0
    %v3199 = vadd.f32 %v3158, %v3198
    %v3200 = vpop.f32.mrb[0].mxu0
    %3201 = vdwg.mxu0
    %3202 = vmax.xlane.f32.xlu0 %v3196
    %v3203 = vpop.xlane.xlu0 %3202
    %3204 = vmax.xlane.f32.xlu0 %v3199
    %v3205 = vpop.xlane.xlu0 %3204
    %v3206 = vsub.f32 %v3196, %v3203
    %v3207 = vsub.f32 %v3199, %v3205
    %v3208 = vmul.f32 %v3206, 1.442695
    %v3209 = vpow.pop %v3208
    %v3210 = vmul.f32 %v3207, 1.442695
    %v3211 = vpow.pop %v3210
    %3212 = vadd.xlane.f32.xlu0 %v3209
    %v3213 = vpop.xlane.xlu0 %3212
    %3214 = vadd.xlane.f32.xlu0 %v3211
    %v3215 = vpop.xlane.xlu0 %3214
    %v3216 = vrcp.pop %v3213
    %v3217 = vmul.f32 %v3209, %v3216
    %v3218 = vrcp.pop %v3215
    %v3219 = vmul.f32 %v3211, %v3218
    %3220 = vst [vmem:[#allocation14] sm:$0xff] %v3217
    %3221 = vst [vmem:[#allocation14 + $0x8] sm:$0xff] %v3219
    // Predicated region
    $region58: #{tpu_custom_call.1} parent=1 // pred_check
      _
    $region59: #{tpu_custom_call.1} parent=1 // pred_check_branch
      %3223 = sbr.rel (0) target = $region61
    $region60: #{tpu_custom_call.1} parent=1 // pred_region
      %s3225 = ssub.s32 256, 256
      %3226 = vsyncadd [#allocation4], %s3225
      %s3227 = sshll.u32 [#allocation14], 4
      %s3228 = int_to_ptr.vmem [resolvable:$true] %s3227
      %3233 = dma.vmem_to_hbm [thread:$0]  %s3228, 256, %s7, [#allocation4], 128, 128, 8
    $region61: #{tpu_custom_call.1} parent=1 // pred_fallthru
      _
    // Predicated region
    $region62: #{tpu_custom_call.1} parent=1 // pred_check
      _
    $region63: #{tpu_custom_call.1} parent=1 // pred_check_branch
      %3235 = sbr.rel (0) target = $region65
    $region64: #{tpu_custom_call.1} parent=1 // pred_region
      %3236 = dma.done [#allocation4], 256
    $region65: #{tpu_custom_call.1} parent=1 // pred_fallthru
      _
    %3237 = vsyncpa [#allocation3], 1
    %3238 = vsyncpa [#allocation6], 1
    %3239 = vsyncpa [#allocation9], 1
    %3240 = vsyncpa [#allocation12], 1
    %3241 = vsyncpa [#allocation4], 1

</llo_original>
